<compile_context>
chip_gen: v5e
topology: v5e:2x2
jax: 0.10.0
libtpu: 0.0.40
codegen_flags: <defaults>
</compile_context>

<pallas_src>
import jax
import jax.numpy as jnp
from jax.experimental import pallas as pl
from jax.experimental.pallas import tpu as pltpu


# ----------------------------------------------------------------------------
# Kernel 1: fused LSTM layer.
#   Phase A (off the critical path): gates_x = x @ W_ih^T + (b_ih + b_hh)
#     as ONE (T*B, I) x (I, 4H) MXU matmul, result kept in VMEM scratch.
#   Phase B (sequential): in-kernel time loop, h/c carried in VMEM scratch,
#     only the (B, H) x (H, 4H) recurrent matmul per step.
# ----------------------------------------------------------------------------
def _lstm_layer_kernel(x_ref, wih_ref, whh_ref, b_ref, y_ref, gx_sc, h_sc, c_sc):
    T, B, I = x_ref.shape
    H = h_sc.shape[-1]

    # Hoisted input projection for the whole sequence (large-M MXU matmul).
    x_flat = x_ref[...].reshape(T * B, I)
    gx_sc[...] = (
        jnp.dot(x_flat, wih_ref[...], preferred_element_type=jnp.float32)
        + b_ref[...]
    ).reshape(T, B, 4 * H)

    h_sc[...] = jnp.zeros_like(h_sc)      # init_hidden() -> zeros
    c_sc[...] = jnp.zeros_like(c_sc)
    whh = whh_ref[...]                    # (H, 4H), loaded once, loop-invariant

    @pl.loop(0, T)
    def _(t):
        # gates = precomputed x-part + recurrent part  (B, 4H); order i,f,g,o
        g = gx_sc[t] + jnp.dot(h_sc[...], whh,
                               preferred_element_type=jnp.float32)
        i = jax.nn.sigmoid(g[:, 0 * H:1 * H])
        f = jax.nn.sigmoid(g[:, 1 * H:2 * H])
        gg = jnp.tanh(g[:, 2 * H:3 * H])
        o = jax.nn.sigmoid(g[:, 3 * H:4 * H])
        c_new = f * c_sc[...] + i * gg
        h_new = o * jnp.tanh(c_new)
        c_sc[...] = c_new
        h_sc[...] = h_new
        y_ref[t] = h_new.astype(y_ref.dtype)


def lstm_layer(x, w_ih_t, w_hh_t, bias):
    """x: (T, B, I); w_ih_t: (I, 4H); w_hh_t: (H, 4H); bias: (1, 4H) -> (T, B, H)."""
    T, B, I = x.shape
    H = w_hh_t.shape[0]
    # TODO(synk): for very large T*B the (T, B, 4H) gate scratch should be
    # chunked over T (two-kernel pre-pass); fine at these model sizes.
    return pl.pallas_call(
        _lstm_layer_kernel,
        out_shape=jax.ShapeDtypeStruct((T, B, H), jnp.float32),
        scratch_shapes=[pltpu.VMEM((T, B, 4 * H), jnp.float32),
                        pltpu.VMEM((B, H), jnp.float32),
                        pltpu.VMEM((B, H), jnp.float32)],
    )(x, w_ih_t, w_hh_t, bias)


# ----------------------------------------------------------------------------
# Kernel 2: tied decoder. Streams the vocab axis in large aligned tiles,
# keeps a running top-2 (value, index) in scratch, works directly on logits
# (softmax is monotonic so top-k / argmax indices are unchanged).
# Tie-break: lowest global index (first occurrence), consistent across tiles.
# ----------------------------------------------------------------------------
def _decoder_kernel(x_ref, w_ref, b_ref, topk_ref, pred_ref,
                    v1_sc, i1_sc, v2_sc, i2_sc):
    j = pl.program_id(0)
    tile_v = w_ref.shape[1]

    @pl.when(j == 0)
    def _():
        v1_sc[...] = jnp.full_like(v1_sc, -jnp.inf)
        i1_sc[...] = jnp.zeros_like(i1_sc)
        v2_sc[...] = jnp.full_like(v2_sc, -jnp.inf)
        i2_sc[...] = jnp.zeros_like(i2_sc)

    logits = (jnp.dot(x_ref[...], w_ref[...],
                      preferred_element_type=jnp.float32)
              + b_ref[...])                                        # (B, tile_v)
    iota = jax.lax.broadcasted_iota(jnp.int32, logits.shape, 1) + j * tile_v

    big = jnp.int32(2 ** 30)
    # Local top-1 / top-2 inside this vocab tile (first occurrence on ties).
    m1 = jnp.max(logits, axis=1, keepdims=True)
    idx1 = jnp.min(jnp.where(logits == m1, iota, big), axis=1, keepdims=True)
    masked = jnp.where(iota == idx1, -jnp.inf, logits)
    m2 = jnp.max(masked, axis=1, keepdims=True)
    idx2 = jnp.min(jnp.where(masked == m2, iota, big), axis=1, keepdims=True)

    # Merge with running top-2 (earlier tiles always have smaller indices).
    rv1, ri1 = v1_sc[...], i1_sc[...]
    rv2, ri2 = v2_sc[...], i2_sc[...]

    run_wins = (rv1 > m1) | ((rv1 == m1) & (ri1 <= idx1))
    new_v1 = jnp.where(run_wins, rv1, m1)
    new_i1 = jnp.where(run_wins, ri1, idx1)
    # Loser of the top-1 comparison competes against the winner's own #2.
    lose_v = jnp.where(run_wins, m1, rv1)
    lose_i = jnp.where(run_wins, idx1, ri1)
    win2_v = jnp.where(run_wins, rv2, m2)
    win2_i = jnp.where(run_wins, ri2, idx2)
    lose_wins = (lose_v > win2_v) | ((lose_v == win2_v) & (lose_i <= win2_i))
    new_v2 = jnp.where(lose_wins, lose_v, win2_v)
    new_i2 = jnp.where(lose_wins, lose_i, win2_i)

    v1_sc[...] = new_v1
    i1_sc[...] = new_i1
    v2_sc[...] = new_v2
    i2_sc[...] = new_i2

    @pl.when(j == pl.num_programs(0) - 1)
    def _():
        topk_ref[:, 0:1] = i1_sc[...]
        topk_ref[:, 1:2] = i2_sc[...]
        pred_ref[...] = i1_sc[...]


def _pick_vocab_tile(V):
    """Largest 128-multiple tile (<= 2048) dividing V; else the full vocab."""
    if V % 128 != 0:
        return V
    for cand in (2048, 1024, 512, 384, 256, 128):
        if cand <= V and V % cand == 0:
            return cand
    return 128


def decoder_topk(x_last, w_dec_t, b_dec):
    """x_last: (B, ninp); w_dec_t: (ninp, V) tied; b_dec: (1, V)."""
    B, ninp = x_last.shape
    V = w_dec_t.shape[1]
    tile_v = _pick_vocab_tile(V)
    num_tiles = V // tile_v
    topk, pred = pl.pallas_call(
        _decoder_kernel,
        out_shape=(jax.ShapeDtypeStruct((B, 2), jnp.int32),
                   jax.ShapeDtypeStruct((B, 1), jnp.int32)),
        grid=(num_tiles,),
        in_specs=[
            pl.BlockSpec((B, ninp), lambda j: (0, 0)),
            pl.BlockSpec((ninp, tile_v), lambda j: (0, j)),
            pl.BlockSpec((1, tile_v), lambda j: (0, j)),
        ],
        out_specs=(pl.BlockSpec((B, 2), lambda j: (0, 0)),
                   pl.BlockSpec((B, 1), lambda j: (0, 0))),
        scratch_shapes=[pltpu.VMEM((B, 1), jnp.float32),
                        pltpu.VMEM((B, 1), jnp.int32),
                        pltpu.VMEM((B, 1), jnp.float32),
                        pltpu.VMEM((B, 1), jnp.int32)],
        compiler_params=pltpu.CompilerParams(
            dimension_semantics=("arbitrary",)),   # running top-2 reduction
    )(x_last, w_dec_t, b_dec)
    return topk, pred[:, 0]


# ----------------------------------------------------------------------------
# Params (arrays only — pre-transposed once) and full forward.
# ----------------------------------------------------------------------------
def init_params(key, ntoken, ninp, nhid, nlayers, tie_weights=True):
    keys = jax.random.split(key, 1 + 4 * nlayers)
    enc_w = jax.random.uniform(keys[0], (ntoken, ninp), jnp.float32, -0.1, 0.1)
    layers = []
    for l in range(nlayers):
        in_sz = ninp if l == 0 else nhid
        hid_sz = nhid if l != nlayers - 1 else (ninp if tie_weights else nhid)
        stdv = 1.0 / float(hid_sz) ** 0.5
        k = keys[1 + 4 * l:1 + 4 * (l + 1)]
        w_ih = jax.random.uniform(k[0], (4 * hid_sz, in_sz), jnp.float32, -stdv, stdv)
        w_hh = jax.random.uniform(k[1], (4 * hid_sz, hid_sz), jnp.float32, -stdv, stdv)
        b_ih = jax.random.uniform(k[2], (4 * hid_sz,), jnp.float32, -stdv, stdv)
        b_hh = jax.random.uniform(k[3], (4 * hid_sz,), jnp.float32, -stdv, stdv)
        layers.append(dict(
            w_ih_t=jnp.asarray(w_ih.T),                       # (in, 4H)
            w_hh_t=jnp.asarray(w_hh.T),                       # (H, 4H)
            bias=(b_ih + b_hh).reshape(1, 4 * hid_sz),        # (1, 4H)
        ))
    return dict(
        enc_w=enc_w,                                          # (V, ninp) embedding
        enc_w_t=jnp.asarray(enc_w.T),                         # (ninp, V) tied decoder
        layers=layers,
        dec_b=jnp.zeros((1, ntoken), jnp.float32),
    )


@jax.jit
def rnn_model_forward(params, tokens):
    """tokens: (T, B) int32 -> (topk_indices (B, 2), predicted (B,))."""
    # TODO(synk): embedding gather kept as plain-JAX glue (data-dependent gather).
    emb = jnp.take(params["enc_w"], tokens, axis=0)           # (T, B, ninp)
    raw = emb
    for lyr in params["layers"]:
        raw = lstm_layer(raw, lyr["w_ih_t"], lyr["w_hh_t"], lyr["bias"])
    x_last = raw[-1]                                          # (B, ninp) (tied dims)
    return decoder_topk(x_last, params["enc_w_t"], params["dec_b"])


if __name__ == "__main__":
    # Small, vreg-aligned demo shapes (B mult of 8; ninp/nhid mult of 128).
    ntoken, ninp, nhid, nlayers = 256, 128, 128, 2
    T, B = 8, 8

    key = jax.random.PRNGKey(0)
    pkey, tkey = jax.random.split(key)
    params = init_params(pkey, ntoken, ninp, nhid, nlayers, tie_weights=True)
    tokens = jax.random.randint(tkey, (T, B), 0, ntoken, dtype=jnp.int32)

    topk_indices, predicted = rnn_model_forward(params, tokens)
    jax.block_until_ready((topk_indices, predicted))

    assert topk_indices.shape == (B, 2)
    assert predicted.shape == (B,)
    # predicted word must equal top-1 of the top-k result (as in the torch module)
    assert bool(jnp.all(topk_indices[:, 0] == predicted))
    print("KERNEL_OK")
</pallas_src>

<mosaic_0001>
module attributes {stable_mosaic.version = 11 : i64} {
  func.func @_lstm_layer_kernel(%arg0: memref<8x8x128xf32, #tpu.memory_space<vmem>>, %arg1: memref<128x512xf32, #tpu.memory_space<vmem>>, %arg2: memref<128x512xf32, #tpu.memory_space<vmem>>, %arg3: memref<1x512xf32, #tpu.memory_space<vmem>>, %arg4: memref<8x8x128xf32, #tpu.memory_space<vmem>>, %arg5: memref<8x8x512xf32, #tpu.memory_space<vmem>>, %arg6: memref<8x128xf32, #tpu.memory_space<vmem>>, %arg7: memref<8x128xf32, #tpu.memory_space<vmem>>) attributes {dimension_semantics = [], scalar_prefetch = 0 : i64, scratch_operands = 3 : i64, tpu.core_type = #tpu.core_type<tc>} {
    %c0 = arith.constant 0 : index
    %c0_0 = arith.constant 0 : index
    %c0_1 = arith.constant 0 : index
    %0 = vector.load %arg0[%c0, %c0_0, %c0_1] : memref<8x8x128xf32, #tpu.memory_space<vmem>>, vector<8x8x128xf32>
    %1 = vector.shape_cast %0 : vector<8x8x128xf32> to vector<64x128xf32>
    %c0_2 = arith.constant 0 : index
    %c0_3 = arith.constant 0 : index
    %2 = vector.load %arg1[%c0_2, %c0_3] : memref<128x512xf32, #tpu.memory_space<vmem>>, vector<128x512xf32>
    %cst = arith.constant dense<0.000000e+00> : vector<64x512xf32>
    %3 = tpu.matmul %1, %2, %cst {dimension_numbers = #tpu.dot_dimension_numbers<[1], [0], [0], [1], [0, 0, 1, 1], [], []>} : vector<64x128xf32>, vector<128x512xf32>, vector<64x512xf32> -> vector<64x512xf32>
    %c0_4 = arith.constant 0 : index
    %c0_5 = arith.constant 0 : index
    %4 = vector.load %arg3[%c0_4, %c0_5] : memref<1x512xf32, #tpu.memory_space<vmem>>, vector<1x512xf32>
    %5 = vector.broadcast %4 : vector<1x512xf32> to vector<64x512xf32>
    %6 = arith.addf %3, %5 : vector<64x512xf32>
    %7 = vector.shape_cast %6 : vector<64x512xf32> to vector<8x8x512xf32>
    %c0_6 = arith.constant 0 : index
    %c0_7 = arith.constant 0 : index
    %c0_8 = arith.constant 0 : index
    %8 = vector.load %arg5[%c0_6, %c0_7, %c0_8] : memref<8x8x512xf32, #tpu.memory_space<vmem>>, vector<8x8x512xf32>
    tpu.vector_store %arg5[%c0_6, %c0_7, %c0_8], %7 {strides = array<i32>} : memref<8x8x512xf32, #tpu.memory_space<vmem>>, vector<8x8x512xf32>,
    %cst_9 = arith.constant 0.000000e+00 : f32
    %9 = vector.broadcast %cst_9 : f32 to vector<8x128xf32>
    %c0_10 = arith.constant 0 : index
    %c0_11 = arith.constant 0 : index
    %10 = vector.load %arg6[%c0_10, %c0_11] : memref<8x128xf32, #tpu.memory_space<vmem>>, vector<8x128xf32>
    tpu.vector_store %arg6[%c0_10, %c0_11], %9 {strides = array<i32>} : memref<8x128xf32, #tpu.memory_space<vmem>>, vector<8x128xf32>,
    %cst_12 = arith.constant 0.000000e+00 : f32
    %11 = vector.broadcast %cst_12 : f32 to vector<8x128xf32>
    %c0_13 = arith.constant 0 : index
    %c0_14 = arith.constant 0 : index
    %12 = vector.load %arg7[%c0_13, %c0_14] : memref<8x128xf32, #tpu.memory_space<vmem>>, vector<8x128xf32>
    tpu.vector_store %arg7[%c0_13, %c0_14], %11 {strides = array<i32>} : memref<8x128xf32, #tpu.memory_space<vmem>>, vector<8x128xf32>,
    %c0_15 = arith.constant 0 : index
    %c0_16 = arith.constant 0 : index
    %13 = vector.load %arg2[%c0_15, %c0_16] : memref<128x512xf32, #tpu.memory_space<vmem>>, vector<128x512xf32>
    %c0_i32 = arith.constant 0 : i32
    %c8_i32 = arith.constant 8 : i32
    %14 = arith.addi %c0_i32, %c8_i32 : i32
    %c1_i32 = arith.constant 1 : i32
    scf.for %arg8 = %c0_i32 to %14 step %c1_i32  : i32 {
      %c1_i32_18 = arith.constant 1 : i32
      %15 = arith.muli %arg8, %c1_i32_18 : i32
      %c0_i32_19 = arith.constant 0 : i32
      %16 = arith.addi %c0_i32_19, %15 : i32
      %17 = arith.index_cast %16 : i32 to index
      %c0_20 = arith.constant 0 : index
      %c0_21 = arith.constant 0 : index
      %18 = vector.load %arg5[%17, %c0_20, %c0_21] : memref<8x8x512xf32, #tpu.memory_space<vmem>>, vector<1x8x512xf32>
      %19 = vector.shape_cast %18 : vector<1x8x512xf32> to vector<8x512xf32>
      %c0_22 = arith.constant 0 : index
      %c0_23 = arith.constant 0 : index
      %20 = vector.load %arg6[%c0_22, %c0_23] : memref<8x128xf32, #tpu.memory_space<vmem>>, vector<8x128xf32>
      %cst_24 = arith.constant dense<0.000000e+00> : vector<8x512xf32>
      %21 = tpu.matmul %20, %13, %cst_24 {dimension_numbers = #tpu.dot_dimension_numbers<[1], [0], [0], [1], [0, 0, 1, 1], [], []>} : vector<8x128xf32>, vector<128x512xf32>, vector<8x512xf32> -> vector<8x512xf32>
      %22 = arith.addf %19, %21 : vector<8x512xf32>
      %23 = vector.extract_strided_slice %22 {offsets = [0, 0], sizes = [8, 128], strides = [1, 1]} : vector<8x512xf32> to vector<8x128xf32>
      %24 = arith.negf %23 : vector<8x128xf32>
      %25 = math.exp %24 : vector<8x128xf32>
      %cst_25 = arith.constant 1.000000e+00 : f32
      %26 = vector.broadcast %cst_25 : f32 to vector<8x128xf32>
      %27 = arith.addf %26, %25 : vector<8x128xf32>
      %28 = arith.divf %26, %27 : vector<8x128xf32>
      %29 = vector.extract_strided_slice %22 {offsets = [0, 128], sizes = [8, 128], strides = [1, 1]} : vector<8x512xf32> to vector<8x128xf32>
      %30 = arith.negf %29 : vector<8x128xf32>
      %31 = math.exp %30 : vector<8x128xf32>
      %cst_26 = arith.constant 1.000000e+00 : f32
      %32 = vector.broadcast %cst_26 : f32 to vector<8x128xf32>
      %33 = arith.addf %32, %31 : vector<8x128xf32>
      %34 = arith.divf %32, %33 : vector<8x128xf32>
      %35 = vector.extract_strided_slice %22 {offsets = [0, 256], sizes = [8, 128], strides = [1, 1]} : vector<8x512xf32> to vector<8x128xf32>
      %36 = math.tanh %35 : vector<8x128xf32>
      %37 = vector.extract_strided_slice %22 {offsets = [0, 384], sizes = [8, 128], strides = [1, 1]} : vector<8x512xf32> to vector<8x128xf32>
      %38 = arith.negf %37 : vector<8x128xf32>
      %39 = math.exp %38 : vector<8x128xf32>
      %cst_27 = arith.constant 1.000000e+00 : f32
      %40 = vector.broadcast %cst_27 : f32 to vector<8x128xf32>
      %41 = arith.addf %40, %39 : vector<8x128xf32>
      %42 = arith.divf %40, %41 : vector<8x128xf32>
      %c0_28 = arith.constant 0 : index
      %c0_29 = arith.constant 0 : index
      %43 = vector.load %arg7[%c0_28, %c0_29] : memref<8x128xf32, #tpu.memory_space<vmem>>, vector<8x128xf32>
      %44 = arith.mulf %34, %43 : vector<8x128xf32>
      %45 = arith.mulf %28, %36 : vector<8x128xf32>
      %46 = arith.addf %44, %45 : vector<8x128xf32>
      %47 = math.tanh %46 : vector<8x128xf32>
      %48 = arith.mulf %42, %47 : vector<8x128xf32>
      %c0_30 = arith.constant 0 : index
      %c0_31 = arith.constant 0 : index
      %49 = vector.load %arg7[%c0_30, %c0_31] : memref<8x128xf32, #tpu.memory_space<vmem>>, vector<8x128xf32>
      tpu.vector_store %arg7[%c0_30, %c0_31], %46 {strides = array<i32>} : memref<8x128xf32, #tpu.memory_space<vmem>>, vector<8x128xf32>,
      %c0_32 = arith.constant 0 : index
      %c0_33 = arith.constant 0 : index
      %50 = vector.load %arg6[%c0_32, %c0_33] : memref<8x128xf32, #tpu.memory_space<vmem>>, vector<8x128xf32>
      tpu.vector_store %arg6[%c0_32, %c0_33], %48 {strides = array<i32>} : memref<8x128xf32, #tpu.memory_space<vmem>>, vector<8x128xf32>,
      %51 = arith.index_cast %16 : i32 to index
      %c0_34 = arith.constant 0 : index
      %c0_35 = arith.constant 0 : index
      %52 = vector.load %arg4[%51, %c0_34, %c0_35] : memref<8x8x128xf32, #tpu.memory_space<vmem>>, vector<1x8x128xf32>
      %53 = vector.shape_cast %52 : vector<1x8x128xf32> to vector<8x128xf32>
      %54 = vector.shape_cast %48 : vector<8x128xf32> to vector<1x8x128xf32>
      tpu.vector_store %arg4[%51, %c0_34, %c0_35], %54 {strides = array<i32>} : memref<8x8x128xf32, #tpu.memory_space<vmem>>, vector<1x8x128xf32>,
    }
    %c8_i32_17 = arith.constant 8 : i32
    return
  }
}

module attributes {stable_mosaic.version = 11 : i64} {
  func.func @_lstm_layer_kernel(%arg0: memref<8x8x128xf32, #tpu.memory_space<vmem>>, %arg1: memref<128x512xf32, #tpu.memory_space<vmem>>, %arg2: memref<128x512xf32, #tpu.memory_space<vmem>>, %arg3: memref<1x512xf32, #tpu.memory_space<vmem>>, %arg4: memref<8x8x128xf32, #tpu.memory_space<vmem>>, %arg5: memref<8x8x512xf32, #tpu.memory_space<vmem>>, %arg6: memref<8x128xf32, #tpu.memory_space<vmem>>, %arg7: memref<8x128xf32, #tpu.memory_space<vmem>>) attributes {dimension_semantics = [], scalar_prefetch = 0 : i64, scratch_operands = 3 : i64, tpu.core_type = #tpu.core_type<tc>} {
    %c0 = arith.constant 0 : index
    %c0_0 = arith.constant 0 : index
    %c0_1 = arith.constant 0 : index
    %0 = vector.load %arg0[%c0, %c0_0, %c0_1] : memref<8x8x128xf32, #tpu.memory_space<vmem>>, vector<8x8x128xf32>
    %1 = vector.shape_cast %0 : vector<8x8x128xf32> to vector<64x128xf32>
    %c0_2 = arith.constant 0 : index
    %c0_3 = arith.constant 0 : index
    %2 = vector.load %arg1[%c0_2, %c0_3] : memref<128x512xf32, #tpu.memory_space<vmem>>, vector<128x512xf32>
    %cst = arith.constant dense<0.000000e+00> : vector<64x512xf32>
    %3 = tpu.matmul %1, %2, %cst {dimension_numbers = #tpu.dot_dimension_numbers<[1], [0], [0], [1], [0, 0, 1, 1], [], []>} : vector<64x128xf32>, vector<128x512xf32>, vector<64x512xf32> -> vector<64x512xf32>
    %c0_4 = arith.constant 0 : index
    %c0_5 = arith.constant 0 : index
    %4 = vector.load %arg3[%c0_4, %c0_5] : memref<1x512xf32, #tpu.memory_space<vmem>>, vector<1x512xf32>
    %5 = vector.broadcast %4 : vector<1x512xf32> to vector<64x512xf32>
    %6 = arith.addf %3, %5 : vector<64x512xf32>
    %7 = vector.shape_cast %6 : vector<64x512xf32> to vector<8x8x512xf32>
    %c0_6 = arith.constant 0 : index
    %c0_7 = arith.constant 0 : index
    %c0_8 = arith.constant 0 : index
    %8 = vector.load %arg5[%c0_6, %c0_7, %c0_8] : memref<8x8x512xf32, #tpu.memory_space<vmem>>, vector<8x8x512xf32>
    tpu.vector_store %arg5[%c0_6, %c0_7, %c0_8], %7 {strides = array<i32>} : memref<8x8x512xf32, #tpu.memory_space<vmem>>, vector<8x8x512xf32>,
    %cst_9 = arith.constant 0.000000e+00 : f32
    %9 = vector.broadcast %cst_9 : f32 to vector<8x128xf32>
    %c0_10 = arith.constant 0 : index
    %c0_11 = arith.constant 0 : index
    %10 = vector.load %arg6[%c0_10, %c0_11] : memref<8x128xf32, #tpu.memory_space<vmem>>, vector<8x128xf32>
    tpu.vector_store %arg6[%c0_10, %c0_11], %9 {strides = array<i32>} : memref<8x128xf32, #tpu.memory_space<vmem>>, vector<8x128xf32>,
    %cst_12 = arith.constant 0.000000e+00 : f32
    %11 = vector.broadcast %cst_12 : f32 to vector<8x128xf32>
    %c0_13 = arith.constant 0 : index
    %c0_14 = arith.constant 0 : index
    %12 = vector.load %arg7[%c0_13, %c0_14] : memref<8x128xf32, #tpu.memory_space<vmem>>, vector<8x128xf32>
    tpu.vector_store %arg7[%c0_13, %c0_14], %11 {strides = array<i32>} : memref<8x128xf32, #tpu.memory_space<vmem>>, vector<8x128xf32>,
    %c0_15 = arith.constant 0 : index
    %c0_16 = arith.constant 0 : index
    %13 = vector.load %arg2[%c0_15, %c0_16] : memref<128x512xf32, #tpu.memory_space<vmem>>, vector<128x512xf32>
    %c0_i32 = arith.constant 0 : i32
    %c8_i32 = arith.constant 8 : i32
    %14 = arith.addi %c0_i32, %c8_i32 : i32
    %c1_i32 = arith.constant 1 : i32
    scf.for %arg8 = %c0_i32 to %14 step %c1_i32  : i32 {
      %c1_i32_18 = arith.constant 1 : i32
      %15 = arith.muli %arg8, %c1_i32_18 : i32
      %c0_i32_19 = arith.constant 0 : i32
      %16 = arith.addi %c0_i32_19, %15 : i32
      %17 = arith.index_cast %16 : i32 to index
      %c0_20 = arith.constant 0 : index
      %c0_21 = arith.constant 0 : index
      %18 = vector.load %arg5[%17, %c0_20, %c0_21] : memref<8x8x512xf32, #tpu.memory_space<vmem>>, vector<1x8x512xf32>
      %19 = vector.shape_cast %18 : vector<1x8x512xf32> to vector<8x512xf32>
      %c0_22 = arith.constant 0 : index
      %c0_23 = arith.constant 0 : index
      %20 = vector.load %arg6[%c0_22, %c0_23] : memref<8x128xf32, #tpu.memory_space<vmem>>, vector<8x128xf32>
      %cst_24 = arith.constant dense<0.000000e+00> : vector<8x512xf32>
      %21 = tpu.matmul %20, %13, %cst_24 {dimension_numbers = #tpu.dot_dimension_numbers<[1], [0], [0], [1], [0, 0, 1, 1], [], []>} : vector<8x128xf32>, vector<128x512xf32>, vector<8x512xf32> -> vector<8x512xf32>
      %22 = arith.addf %19, %21 : vector<8x512xf32>
      %23 = vector.extract_strided_slice %22 {offsets = [0, 0], sizes = [8, 128], strides = [1, 1]} : vector<8x512xf32> to vector<8x128xf32>
      %24 = arith.negf %23 : vector<8x128xf32>
      %25 = math.exp %24 : vector<8x128xf32>
      %cst_25 = arith.constant 1.000000e+00 : f32
      %26 = vector.broadcast %cst_25 : f32 to vector<8x128xf32>
      %27 = arith.addf %26, %25 : vector<8x128xf32>
      %28 = arith.divf %26, %27 : vector<8x128xf32>
      %29 = vector.extract_strided_slice %22 {offsets = [0, 128], sizes = [8, 128], strides = [1, 1]} : vector<8x512xf32> to vector<8x128xf32>
      %30 = arith.negf %29 : vector<8x128xf32>
      %31 = math.exp %30 : vector<8x128xf32>
      %cst_26 = arith.constant 1.000000e+00 : f32
      %32 = vector.broadcast %cst_26 : f32 to vector<8x128xf32>
      %33 = arith.addf %32, %31 : vector<8x128xf32>
      %34 = arith.divf %32, %33 : vector<8x128xf32>
      %35 = vector.extract_strided_slice %22 {offsets = [0, 256], sizes = [8, 128], strides = [1, 1]} : vector<8x512xf32> to vector<8x128xf32>
      %36 = math.tanh %35 : vector<8x128xf32>
      %37 = vector.extract_strided_slice %22 {offsets = [0, 384], sizes = [8, 128], strides = [1, 1]} : vector<8x512xf32> to vector<8x128xf32>
      %38 = arith.negf %37 : vector<8x128xf32>
      %39 = math.exp %38 : vector<8x128xf32>
      %cst_27 = arith.constant 1.000000e+00 : f32
      %40 = vector.broadcast %cst_27 : f32 to vector<8x128xf32>
      %41 = arith.addf %40, %39 : vector<8x128xf32>
      %42 = arith.divf %40, %41 : vector<8x128xf32>
      %c0_28 = arith.constant 0 : index
      %c0_29 = arith.constant 0 : index
      %43 = vector.load %arg7[%c0_28, %c0_29] : memref<8x128xf32, #tpu.memory_space<vmem>>, vector<8x128xf32>
      %44 = arith.mulf %34, %43 : vector<8x128xf32>
      %45 = arith.mulf %28, %36 : vector<8x128xf32>
      %46 = arith.addf %44, %45 : vector<8x128xf32>
      %47 = math.tanh %46 : vector<8x128xf32>
      %48 = arith.mulf %42, %47 : vector<8x128xf32>
      %c0_30 = arith.constant 0 : index
      %c0_31 = arith.constant 0 : index
      %49 = vector.load %arg7[%c0_30, %c0_31] : memref<8x128xf32, #tpu.memory_space<vmem>>, vector<8x128xf32>
      tpu.vector_store %arg7[%c0_30, %c0_31], %46 {strides = array<i32>} : memref<8x128xf32, #tpu.memory_space<vmem>>, vector<8x128xf32>,
      %c0_32 = arith.constant 0 : index
      %c0_33 = arith.constant 0 : index
      %50 = vector.load %arg6[%c0_32, %c0_33] : memref<8x128xf32, #tpu.memory_space<vmem>>, vector<8x128xf32>
      tpu.vector_store %arg6[%c0_32, %c0_33], %48 {strides = array<i32>} : memref<8x128xf32, #tpu.memory_space<vmem>>, vector<8x128xf32>,
      %51 = arith.index_cast %16 : i32 to index
      %c0_34 = arith.constant 0 : index
      %c0_35 = arith.constant 0 : index
      %52 = vector.load %arg4[%51, %c0_34, %c0_35] : memref<8x8x128xf32, #tpu.memory_space<vmem>>, vector<1x8x128xf32>
      %53 = vector.shape_cast %52 : vector<1x8x128xf32> to vector<8x128xf32>
      %54 = vector.shape_cast %48 : vector<8x128xf32> to vector<1x8x128xf32>
      tpu.vector_store %arg4[%51, %c0_34, %c0_35], %54 {strides = array<i32>} : memref<8x8x128xf32, #tpu.memory_space<vmem>>, vector<1x8x128xf32>,
    }
    %c8_i32_17 = arith.constant 8 : i32
    return
  }
}

module attributes {stable_mosaic.version = 11 : i64} {
  func.func @_decoder_kernel(%arg0: i32, %arg1: memref<8x128xf32, #tpu.memory_space<vmem>>, %arg2: memref<128x256xf32, #tpu.memory_space<vmem>>, %arg3: memref<1x256xf32, #tpu.memory_space<vmem>>, %arg4: memref<8x2xi32, #tpu.memory_space<vmem>>, %arg5: memref<8x1xi32, #tpu.memory_space<vmem>>, %arg6: memref<8x1xf32, #tpu.memory_space<vmem>>, %arg7: memref<8x1xi32, #tpu.memory_space<vmem>>, %arg8: memref<8x1xf32, #tpu.memory_space<vmem>>, %arg9: memref<8x1xi32, #tpu.memory_space<vmem>>) attributes {dimension_semantics = [#tpu.dimension_semantics<arbitrary>], iteration_bounds = array<i64: 1>, scalar_prefetch = 0 : i64, scratch_operands = 4 : i64, tpu.core_type = #tpu.core_type<tc>, window_params = [{pipeline_mode = #tpu.pipeline_mode<synchronous>, transform_indices = @transform_0, window_bounds = array<i64: 8, 128>}, {transform_indices = @transform_1, window_bounds = array<i64: 128, 256>}, {transform_indices = @transform_2, window_bounds = array<i64: 1, 256>}, {pipeline_mode = #tpu.pipeline_mode<synchronous>, transform_indices = @transform_3, window_bounds = array<i64: 8, 2>}, {pipeline_mode = #tpu.pipeline_mode<synchronous>, transform_indices = @transform_4, window_bounds = array<i64: 8, 1>}]} {
    %c0_i32 = arith.constant 0 : i32
    %0 = arith.cmpi eq, %arg0, %c0_i32 : i32
    %1 = arith.extui %0 : i1 to i32
    %c0_i32_0 = arith.constant 0 : i32
    %2 = arith.cmpi ne, %1, %c0_i32_0 : i32
    scf.if %2 {
      %cst_30 = arith.constant 0xFF800000 : f32
      %62 = vector.broadcast %cst_30 : f32 to vector<8x1xf32>
      %c0_31 = arith.constant 0 : index
      %c0_32 = arith.constant 0 : index
      %63 = vector.load %arg6[%c0_31, %c0_32] : memref<8x1xf32, #tpu.memory_space<vmem>>, vector<8x1xf32>
      tpu.vector_store %arg6[%c0_31, %c0_32], %62 {strides = array<i32>} : memref<8x1xf32, #tpu.memory_space<vmem>>, vector<8x1xf32>,
      %c0_i32_33 = arith.constant 0 : i32
      %64 = vector.broadcast %c0_i32_33 : i32 to vector<8x1xi32>
      %c0_34 = arith.constant 0 : index
      %c0_35 = arith.constant 0 : index
      %65 = vector.load %arg7[%c0_34, %c0_35] : memref<8x1xi32, #tpu.memory_space<vmem>>, vector<8x1xi32>
      tpu.vector_store %arg7[%c0_34, %c0_35], %64 {strides = array<i32>} : memref<8x1xi32, #tpu.memory_space<vmem>>, vector<8x1xi32>,
      %cst_36 = arith.constant 0xFF800000 : f32
      %66 = vector.broadcast %cst_36 : f32 to vector<8x1xf32>
      %c0_37 = arith.constant 0 : index
      %c0_38 = arith.constant 0 : index
      %67 = vector.load %arg8[%c0_37, %c0_38] : memref<8x1xf32, #tpu.memory_space<vmem>>, vector<8x1xf32>
      tpu.vector_store %arg8[%c0_37, %c0_38], %66 {strides = array<i32>} : memref<8x1xf32, #tpu.memory_space<vmem>>, vector<8x1xf32>,
      %c0_i32_39 = arith.constant 0 : i32
      %68 = vector.broadcast %c0_i32_39 : i32 to vector<8x1xi32>
      %c0_40 = arith.constant 0 : index
      %c0_41 = arith.constant 0 : index
      %69 = vector.load %arg9[%c0_40, %c0_41] : memref<8x1xi32, #tpu.memory_space<vmem>>, vector<8x1xi32>
      tpu.vector_store %arg9[%c0_40, %c0_41], %68 {strides = array<i32>} : memref<8x1xi32, #tpu.memory_space<vmem>>, vector<8x1xi32>,
    } else {
    }
    %c0 = arith.constant 0 : index
    %c0_1 = arith.constant 0 : index
    %3 = vector.load %arg1[%c0, %c0_1] : memref<8x128xf32, #tpu.memory_space<vmem>>, vector<8x128xf32>
    %c0_2 = arith.constant 0 : index
    %c0_3 = arith.constant 0 : index
    %4 = vector.load %arg2[%c0_2, %c0_3] : memref<128x256xf32, #tpu.memory_space<vmem>>, vector<128x256xf32>
    %cst = arith.constant dense<0.000000e+00> : vector<8x256xf32>
    %5 = tpu.matmul %3, %4, %cst {dimension_numbers = #tpu.dot_dimension_numbers<[1], [0], [0], [1], [0, 0, 1, 1], [], []>} : vector<8x128xf32>, vector<128x256xf32>, vector<8x256xf32> -> vector<8x256xf32>
    %c0_4 = arith.constant 0 : index
    %c0_5 = arith.constant 0 : index
    %6 = vector.load %arg3[%c0_4, %c0_5] : memref<1x256xf32, #tpu.memory_space<vmem>>, vector<1x256xf32>
    %7 = vector.broadcast %6 : vector<1x256xf32> to vector<8x256xf32>
    %8 = arith.addf %5, %7 : vector<8x256xf32>
    %9 = tpu.iota {dimensions = array<i32: 1>} : vector<8x256xi32>
    %c256_i32 = arith.constant 256 : i32
    %10 = arith.muli %arg0, %c256_i32 : i32
    %11 = vector.broadcast %10 : i32 to vector<8x256xi32>
    %12 = arith.addi %9, %11 : vector<8x256xi32>
    %cst_6 = arith.constant dense<0xFF800000> : vector<8xf32>
    %13 = vector.multi_reduction <maximumf>, %8, %cst_6 [1] : vector<8x256xf32> to vector<8xf32>
    %14 = vector.shape_cast %13 : vector<8xf32> to vector<8x1xf32>
    %15 = vector.broadcast %14 : vector<8x1xf32> to vector<8x256xf32>
    %16 = arith.cmpf oeq, %8, %15 : vector<8x256xf32>
    %c1073741824_i32 = arith.constant 1073741824 : i32
    %17 = vector.broadcast %c1073741824_i32 : i32 to vector<8x256xi32>
    %18 = arith.select %16, %12, %17 : vector<8x256xi1>, vector<8x256xi32>
    %cst_7 = arith.constant dense<2147483647> : vector<8xi32>
    %19 = vector.multi_reduction <minsi>, %18, %cst_7 [1] : vector<8x256xi32> to vector<8xi32>
    %20 = vector.shape_cast %19 : vector<8xi32> to vector<8x1xi32>
    %21 = vector.broadcast %20 : vector<8x1xi32> to vector<8x256xi32>
    %22 = arith.cmpi eq, %12, %21 : vector<8x256xi32>
    %cst_8 = arith.constant 0xFF800000 : f32
    %23 = vector.broadcast %cst_8 : f32 to vector<8x256xf32>
    %24 = arith.select %22, %23, %8 : vector<8x256xi1>, vector<8x256xf32>
    %cst_9 = arith.constant dense<0xFF800000> : vector<8xf32>
    %25 = vector.multi_reduction <maximumf>, %24, %cst_9 [1] : vector<8x256xf32> to vector<8xf32>
    %26 = vector.shape_cast %25 : vector<8xf32> to vector<8x1xf32>
    %27 = vector.broadcast %26 : vector<8x1xf32> to vector<8x256xf32>
    %28 = arith.cmpf oeq, %24, %27 : vector<8x256xf32>
    %c1073741824_i32_10 = arith.constant 1073741824 : i32
    %29 = vector.broadcast %c1073741824_i32_10 : i32 to vector<8x256xi32>
    %30 = arith.select %28, %12, %29 : vector<8x256xi1>, vector<8x256xi32>
    %cst_11 = arith.constant dense<2147483647> : vector<8xi32>
    %31 = vector.multi_reduction <minsi>, %30, %cst_11 [1] : vector<8x256xi32> to vector<8xi32>
    %32 = vector.shape_cast %31 : vector<8xi32> to vector<8x1xi32>
    %c0_12 = arith.constant 0 : index
    %c0_13 = arith.constant 0 : index
    %33 = vector.load %arg6[%c0_12, %c0_13] : memref<8x1xf32, #tpu.memory_space<vmem>>, vector<8x1xf32>
    %c0_14 = arith.constant 0 : index
    %c0_15 = arith.constant 0 : index
    %34 = vector.load %arg7[%c0_14, %c0_15] : memref<8x1xi32, #tpu.memory_space<vmem>>, vector<8x1xi32>
    %c0_16 = arith.constant 0 : index
    %c0_17 = arith.constant 0 : index
    %35 = vector.load %arg8[%c0_16, %c0_17] : memref<8x1xf32, #tpu.memory_space<vmem>>, vector<8x1xf32>
    %c0_18 = arith.constant 0 : index
    %c0_19 = arith.constant 0 : index
    %36 = vector.load %arg9[%c0_18, %c0_19] : memref<8x1xi32, #tpu.memory_space<vmem>>, vector<8x1xi32>
    %37 = arith.cmpf ogt, %33, %14 : vector<8x1xf32>
    %38 = arith.cmpf oeq, %33, %14 : vector<8x1xf32>
    %39 = arith.cmpi sle, %34, %20 : vector<8x1xi32>
    %40 = arith.andi %38, %39 : vector<8x1xi1>
    %41 = arith.ori %37, %40 : vector<8x1xi1>
    %42 = arith.select %41, %33, %14 : vector<8x1xi1>, vector<8x1xf32>
    %43 = arith.select %41, %34, %20 : vector<8x1xi1>, vector<8x1xi32>
    %44 = arith.select %41, %14, %33 : vector<8x1xi1>, vector<8x1xf32>
    %45 = arith.select %41, %20, %34 : vector<8x1xi1>, vector<8x1xi32>
    %46 = arith.select %41, %35, %26 : vector<8x1xi1>, vector<8x1xf32>
    %47 = arith.select %41, %36, %32 : vector<8x1xi1>, vector<8x1xi32>
    %48 = arith.cmpf ogt, %44, %46 : vector<8x1xf32>
    %49 = arith.cmpf oeq, %44, %46 : vector<8x1xf32>
    %50 = arith.cmpi sle, %45, %47 : vector<8x1xi32>
    %51 = arith.andi %49, %50 : vector<8x1xi1>
    %52 = arith.ori %48, %51 : vector<8x1xi1>
    %53 = arith.select %52, %44, %46 : vector<8x1xi1>, vector<8x1xf32>
    %54 = arith.select %52, %45, %47 : vector<8x1xi1>, vector<8x1xi32>
    %c0_20 = arith.constant 0 : index
    %c0_21 = arith.constant 0 : index
    %55 = vector.load %arg6[%c0_20, %c0_21] : memref<8x1xf32, #tpu.memory_space<vmem>>, vector<8x1xf32>
    tpu.vector_store %arg6[%c0_20, %c0_21], %42 {strides = array<i32>} : memref<8x1xf32, #tpu.memory_space<vmem>>, vector<8x1xf32>,
    %c0_22 = arith.constant 0 : index
    %c0_23 = arith.constant 0 : index
    %56 = vector.load %arg7[%c0_22, %c0_23] : memref<8x1xi32, #tpu.memory_space<vmem>>, vector<8x1xi32>
    tpu.vector_store %arg7[%c0_22, %c0_23], %43 {strides = array<i32>} : memref<8x1xi32, #tpu.memory_space<vmem>>, vector<8x1xi32>,
    %c0_24 = arith.constant 0 : index
    %c0_25 = arith.constant 0 : index
    %57 = vector.load %arg8[%c0_24, %c0_25] : memref<8x1xf32, #tpu.memory_space<vmem>>, vector<8x1xf32>
    tpu.vector_store %arg8[%c0_24, %c0_25], %53 {strides = array<i32>} : memref<8x1xf32, #tpu.memory_space<vmem>>, vector<8x1xf32>,
    %c0_26 = arith.constant 0 : index
    %c0_27 = arith.constant 0 : index
    %58 = vector.load %arg9[%c0_26, %c0_27] : memref<8x1xi32, #tpu.memory_space<vmem>>, vector<8x1xi32>
    tpu.vector_store %arg9[%c0_26, %c0_27], %54 {strides = array<i32>} : memref<8x1xi32, #tpu.memory_space<vmem>>, vector<8x1xi32>,
    %c0_i32_28 = arith.constant 0 : i32
    %59 = arith.cmpi eq, %arg0, %c0_i32_28 : i32
    %60 = arith.extui %59 : i1 to i32
    %c0_i32_29 = arith.constant 0 : i32
    %61 = arith.cmpi ne, %60, %c0_i32_29 : i32
    scf.if %61 {
      %c0_30 = arith.constant 0 : index
      %c0_31 = arith.constant 0 : index
      %62 = vector.load %arg7[%c0_30, %c0_31] : memref<8x1xi32, #tpu.memory_space<vmem>>, vector<8x1xi32>
      %c0_32 = arith.constant 0 : index
      %c0_33 = arith.constant 0 : index
      %63 = vector.load %arg4[%c0_32, %c0_33] : memref<8x2xi32, #tpu.memory_space<vmem>>, vector<8x1xi32>
      tpu.vector_store %arg4[%c0_32, %c0_33], %62 {strides = array<i32>} : memref<8x2xi32, #tpu.memory_space<vmem>>, vector<8x1xi32>,
      %c0_34 = arith.constant 0 : index
      %c0_35 = arith.constant 0 : index
      %64 = vector.load %arg9[%c0_34, %c0_35] : memref<8x1xi32, #tpu.memory_space<vmem>>, vector<8x1xi32>
      %c0_36 = arith.constant 0 : index
      %c1 = arith.constant 1 : index
      %65 = vector.load %arg4[%c0_36, %c1] : memref<8x2xi32, #tpu.memory_space<vmem>>, vector<8x1xi32>
      tpu.vector_store %arg4[%c0_36, %c1], %64 {strides = array<i32>} : memref<8x2xi32, #tpu.memory_space<vmem>>, vector<8x1xi32>,
      %c0_37 = arith.constant 0 : index
      %c0_38 = arith.constant 0 : index
      %66 = vector.load %arg7[%c0_37, %c0_38] : memref<8x1xi32, #tpu.memory_space<vmem>>, vector<8x1xi32>
      %c0_39 = arith.constant 0 : index
      %c0_40 = arith.constant 0 : index
      %67 = vector.load %arg5[%c0_39, %c0_40] : memref<8x1xi32, #tpu.memory_space<vmem>>, vector<8x1xi32>
      tpu.vector_store %arg5[%c0_39, %c0_40], %66 {strides = array<i32>} : memref<8x1xi32, #tpu.memory_space<vmem>>, vector<8x1xi32>,
    } else {
    }
    return
  }
  func.func @transform_0(%arg0: i32) -> (i32, i32) {
    %c0_i32 = arith.constant 0 : i32
    %c0_i32_0 = arith.constant 0 : i32
    %c0_i32_1 = arith.constant 0 : i32
    return %c0_i32, %c0_i32_0 : i32, i32
  }
  func.func @transform_1(%arg0: i32) -> (i32, i32) {
    %c0_i32 = arith.constant 0 : i32
    %c0_i32_0 = arith.constant 0 : i32
    return %c0_i32, %arg0 : i32, i32
  }
  func.func @transform_2(%arg0: i32) -> (i32, i32) {
    %c0_i32 = arith.constant 0 : i32
    %c0_i32_0 = arith.constant 0 : i32
    return %c0_i32, %arg0 : i32, i32
  }
  func.func @transform_3(%arg0: i32) -> (i32, i32) {
    %c0_i32 = arith.constant 0 : i32
    %c0_i32_0 = arith.constant 0 : i32
    %c0_i32_1 = arith.constant 0 : i32
    return %c0_i32, %c0_i32_0 : i32, i32
  }
  func.func @transform_4(%arg0: i32) -> (i32, i32) {
    %c0_i32 = arith.constant 0 : i32
    %c0_i32_0 = arith.constant 0 : i32
    %c0_i32_1 = arith.constant 0 : i32
    return %c0_i32, %c0_i32_0 : i32, i32
  }
}

</mosaic_0001>

<llo_original>
// kernel: rnn_model_forward.5
$region0: #{rnn_model_forward.5}
  #allocation0 [shape = 'u32[]', space=smem, size = 0x4, offset = 0x4, fixed_abs, tag = 'smem constant byte address 0x4 - core index']
  #allocation1 [shape = 'u32[72,128]{1,0:T(1,128)}', space=vmem, size = 0x9000, scoped, tag = 'internal scratch']
  #allocation2 [shape = 'f32[8,1]{1,0:T(8,128)}', space=vmem, size = 0x1000, scoped, tag = 'scratch operand']
  #allocation3 [shape = 's32[8,1]{1,0:T(8,128)}', space=vmem, size = 0x1000, scoped, tag = 'scratch operand']
  #allocation4 [shape = 'f32[8,1]{1,0:T(8,128)}', space=vmem, size = 0x1000, scoped, tag = 'scratch operand']
  #allocation5 [shape = 's32[8,1]{1,0:T(8,128)}', space=vmem, size = 0x1000, scoped, tag = 'scratch operand']
  %s0 = inlined_call_operand.vmem [shape: f32[8,128], index: 0, kind: input, shape index: {}]
  %s1 = inlined_call_operand.vmem [shape: f32[128,256], index: 1, kind: input, shape index: {}]
  %s2 = inlined_call_operand.hbm [shape: f32[1,256], index: 2, kind: input, shape index: {}]
  %s3 = inlined_call_operand.vmem [shape: s32[8,2], index: 3, kind: output, shape index: {0}]
  %s4 = inlined_call_operand.vmem [shape: s32[8,1], index: 4, kind: output, shape index: {1}]
  %5 = xla_tuple %s3, %s4
  %s6 = sld [smem:[#allocation0]]
  $region42: #{rnn_model_forward.5} parent=0
    _
  %s8 = ssub.s32 1, %s6
  %s9 = scalar_select 0, %s8, %s6
  $region1: #{rnn_model_forward.5} parent=0
    #allocation6 [shape = 'u8[1024]{0}', space=vmem, size = 0x400, scoped, tag = 'input window, operand 2, single buffered']
    #allocation7 [shape = 's32[1]{0}', space=sflag, size = 0x4, scoped, tag = 'scoped memory for rnn_model_forward.5']
    %10 = vsyncpa [#allocation7], 0
    // Predicated region
    $region2: #{rnn_model_forward.5} parent=1 // pred_check
      _
    $region3: #{rnn_model_forward.5} parent=1 // pred_check_branch
      %12 = sbr.rel (0) target = $region5
    $region4: #{rnn_model_forward.5} parent=1 // pred_region
      _
    $region5: #{rnn_model_forward.5} parent=1 // pred_fallthru
      _
    // Predicated region
    $region6: #{rnn_model_forward.5} parent=1 // pred_check
      _
    $region7: #{rnn_model_forward.5} parent=1 // pred_check_branch
      %14 = sbr.rel (0) target = $region9
    $region8: #{rnn_model_forward.5} parent=1 // pred_region
      _
    $region9: #{rnn_model_forward.5} parent=1 // pred_fallthru
      _
    // Predicated region
    $region10: #{rnn_model_forward.5} parent=1 // pred_check
      _
    $region11: #{rnn_model_forward.5} parent=1 // pred_check_branch
      %16 = sbr.rel (0) target = $region13
    $region12: #{rnn_model_forward.5} parent=1 // pred_region
      %18 = vsyncadd [#allocation7], 0
      %s20 = sshll.u32 %s2, 4
      %s21 = int_to_ptr.hbm [resolvable:$true] %s20
      %s22 = sshll.u32 [#allocation6], 4
      %s23 = int_to_ptr.vmem [resolvable:$true] %s22
      %25 = dma.hbm_to_vmem [thread:$0]  %s21, 32, %s23, [#allocation7]
    $region13: #{rnn_model_forward.5} parent=1 // pred_fallthru
      _
    // Predicated region
    $region14: #{rnn_model_forward.5} parent=1 // pred_check
      _
    $region15: #{rnn_model_forward.5} parent=1 // pred_check_branch
      %27 = sbr.rel (0) target = $region17
    $region16: #{rnn_model_forward.5} parent=1 // pred_region
      %29 = dma.done [#allocation7], 32
    $region17: #{rnn_model_forward.5} parent=1 // pred_fallthru
      _
    %p30 = scmp.eq.s32.totalorder 0, 0
    // Predicated region
    $region18: #{rnn_model_forward.5} parent=1 // pred_check
      %p31 = pneg %p30
    $region19: #{rnn_model_forward.5} parent=1 // pred_check_branch
      %33 = sbr.rel (%p31) target = $region21
    $region20: #{rnn_model_forward.5} parent=1 // pred_region
      %vm34 = vcmask 7168
      %35 = vst.msk [vmem:[#allocation2] sm:$0xff] %vm34, -inf
      %36 = vst.msk [vmem:[#allocation3] sm:$0xff] %vm34, 0
      %37 = vst.msk [vmem:[#allocation4] sm:$0xff] %vm34, -inf
      %38 = vst.msk [vmem:[#allocation5] sm:$0xff] %vm34, 0
    $region21: #{rnn_model_forward.5} parent=1 // pred_fallthru
      _
    %v39 = vld [vmem:[%s0] sm:$0xff]
    %v40 = vld [vmem:[%s1] sm:$0xff]
    %v41 = vld [vmem:[%s1 + $0x8] sm:$0xff]
    %v42 = vld [vmem:[%s1 + $0x10] sm:$0xff]
    %v43 = vld [vmem:[%s1 + $0x18] sm:$0xff]
    %v44 = vld [vmem:[%s1 + $0x20] sm:$0xff]
    %v45 = vld [vmem:[%s1 + $0x28] sm:$0xff]
    %v46 = vld [vmem:[%s1 + $0x30] sm:$0xff]
    %v47 = vld [vmem:[%s1 + $0x38] sm:$0xff]
    %v48 = vld [vmem:[%s1 + $0x40] sm:$0xff]
    %v49 = vld [vmem:[%s1 + $0x48] sm:$0xff]
    %v50 = vld [vmem:[%s1 + $0x50] sm:$0xff]
    %v51 = vld [vmem:[%s1 + $0x58] sm:$0xff]
    %v52 = vld [vmem:[%s1 + $0x60] sm:$0xff]
    %v53 = vld [vmem:[%s1 + $0x68] sm:$0xff]
    %v54 = vld [vmem:[%s1 + $0x70] sm:$0xff]
    %v55 = vld [vmem:[%s1 + $0x78] sm:$0xff]
    %v56 = vld [vmem:[%s1 + $0x80] sm:$0xff]
    %v57 = vld [vmem:[%s1 + $0x88] sm:$0xff]
    %v58 = vld [vmem:[%s1 + $0x90] sm:$0xff]
    %v59 = vld [vmem:[%s1 + $0x98] sm:$0xff]
    %v60 = vld [vmem:[%s1 + $0xa0] sm:$0xff]
    %v61 = vld [vmem:[%s1 + $0xa8] sm:$0xff]
    %v62 = vld [vmem:[%s1 + $0xb0] sm:$0xff]
    %v63 = vld [vmem:[%s1 + $0xb8] sm:$0xff]
    %v64 = vld [vmem:[%s1 + $0xc0] sm:$0xff]
    %v65 = vld [vmem:[%s1 + $0xc8] sm:$0xff]
    %v66 = vld [vmem:[%s1 + $0xd0] sm:$0xff]
    %v67 = vld [vmem:[%s1 + $0xd8] sm:$0xff]
    %v68 = vld [vmem:[%s1 + $0xe0] sm:$0xff]
    %v69 = vld [vmem:[%s1 + $0xe8] sm:$0xff]
    %v70 = vld [vmem:[%s1 + $0xf0] sm:$0xff]
    %v71 = vld [vmem:[%s1 + $0xf8] sm:$0xff]
    %v72 = vld [vmem:[#allocation6] sm:$0x3]
    %v74 = vperm.slane %v72, 0
    %v75 = vperm.slane %v72, 1
    %78 = vmatpush.msra.mxu0 %v70
    %79 = vmatpush.msra.mxu0 %v68
    %80 = vmatpush.msra.mxu0 %v66
    %81 = vmatpush.msra.mxu0 %v64
    %82 = vmatpush.msra.mxu0 %v62
    %83 = vmatpush.msra.mxu0 %v60
    %84 = vmatpush.msra.mxu0 %v58
    %85 = vmatpush.msra.mxu0 %v56
    %86 = vmatpush.msra.mxu0 %v54
    %87 = vmatpush.msra.mxu0 %v52
    %88 = vmatpush.msra.mxu0 %v50
    %89 = vmatpush.msra.mxu0 %v48
    %90 = vmatpush.msra.mxu0 %v46
    %91 = vmatpush.msra.mxu0 %v44
    %92 = vmatpush.msra.mxu0 %v42
    %93 = vmatpush.msra.mxu0 %v40
    %94 = vmatmul.f32.gmra.mxu0 %v39
    %v95 = vpop.f32.mrf.mxu0
    %v96 = vadd.f32 %v74, %v95
    %97 = vdwg.mxu0
    %98 = vmatpush.msra.mxu0 %v71
    %99 = vmatpush.msra.mxu0 %v69
    %100 = vmatpush.msra.mxu0 %v67
    %101 = vmatpush.msra.mxu0 %v65
    %102 = vmatpush.msra.mxu0 %v63
    %103 = vmatpush.msra.mxu0 %v61
    %104 = vmatpush.msra.mxu0 %v59
    %105 = vmatpush.msra.mxu0 %v57
    %106 = vmatpush.msra.mxu0 %v55
    %107 = vmatpush.msra.mxu0 %v53
    %108 = vmatpush.msra.mxu0 %v51
    %109 = vmatpush.msra.mxu0 %v49
    %110 = vmatpush.msra.mxu0 %v47
    %111 = vmatpush.msra.mxu0 %v45
    %112 = vmatpush.msra.mxu0 %v43
    %113 = vmatpush.msra.mxu0 %v41
    %114 = vmatmul.f32.gmra.mxu0 %v39
    %v115 = vpop.f32.mrf.mxu0
    %v116 = vadd.f32 %v75, %v115
    %117 = vdwg.mxu0
    %v118 = vlaneseq
    %v119 = vand.u32 %v118, 127
    %v120 = vadd.s32 %v119, 128
    %s121 = smul.u32 0, 256
    %v122 = vstv %s121
    %v123 = vadd.s32 %v119, %v122
    %v124 = vadd.s32 %v120, %v122
    %v125 = vmax.f32 %v96, %v116
    %126 = vmax.xlane.f32.xlu0 %v125
    %v127 = vpop.xlane.xlu0 %126
    %vm128 = vcmp.eq.f32.partialorder %v96, %v127
    %vm129 = vcmp.eq.f32.partialorder %v116, %v127
    %v130 = vsel %vm128, %v123, 1073741824
    %v131 = vsel %vm129, %v124, 1073741824
    %vm132 = vcmp.lt.s32.totalorder %v130, %v131
    %v133 = vsel %vm132, %v130, %v131
    %v134 = vand.u32 %v133, 65535
    %v135 = vshra.s32 %v133, 16
    %v136 = vcvt.s32.f32 %v134
    %v137 = vcvt.s32.f32 %v135
    %138 = vmin.xlane.f32.xlu0 %v137
    %v139 = vpop.xlane.xlu0 %138
    %vm140 = vcmp.eq.f32.partialorder %v137, %v139
    %v141 = vsel %vm140, %v136, inf
    %142 = vmin.xlane.f32.xlu0 %v141
    %v143 = vpop.xlane.xlu0 %142
    %v144 = vcvt.f32.s32 %v143
    %v145 = vcvt.f32.s32 %v139
    %v146 = vshll.u32 %v145, 16
    %v147 = vadd.s32 %v146, %v144
    %vm148 = vcmp.eq.s32.totalorder %v123, %v147
    %vm149 = vcmp.eq.s32.totalorder %v124, %v147
    %v150 = vsel %vm148, -inf, %v96
    %v151 = vsel %vm149, -inf, %v116
    %v152 = vmax.f32 %v150, %v151
    %153 = vmax.xlane.f32.xlu0 %v152
    %v154 = vpop.xlane.xlu0 %153
    %vm155 = vcmp.eq.f32.partialorder %v150, %v154
    %vm156 = vcmp.eq.f32.partialorder %v151, %v154
    %v157 = vsel %vm155, %v123, 1073741824
    %v158 = vsel %vm156, %v124, 1073741824
    %vm159 = vcmp.lt.s32.totalorder %v157, %v158
    %v160 = vsel %vm159, %v157, %v158
    %v161 = vand.u32 %v160, 65535
    %v162 = vshra.s32 %v160, 16
    %v163 = vcvt.s32.f32 %v161
    %v164 = vcvt.s32.f32 %v162
    %165 = vmin.xlane.f32.xlu0 %v164
    %v166 = vpop.xlane.xlu0 %165
    %vm167 = vcmp.eq.f32.partialorder %v164, %v166
    %v168 = vsel %vm167, %v163, inf
    %169 = vmin.xlane.f32.xlu0 %v168
    %v170 = vpop.xlane.xlu0 %169
    %v171 = vcvt.f32.s32 %v170
    %v172 = vcvt.f32.s32 %v166
    %v173 = vshll.u32 %v172, 16
    %v174 = vadd.s32 %v173, %v171
    %v175 = vld [vmem:[#allocation2] sm:$0xff]
    %v176 = vld [vmem:[#allocation3] sm:$0xff]
    %v177 = vld [vmem:[#allocation4] sm:$0xff]
    %v178 = vld [vmem:[#allocation5] sm:$0xff]
    %vm179 = vcmp.gt.f32.partialorder %v175, %v127
    %vm180 = vcmp.eq.f32.partialorder %v175, %v127
    %vm181 = vcmp.le.s32.totalorder %v176, %v147
    %vm182 = vmand %vm180, %vm181
    %vm183 = vmor %vm179, %vm182
    %v184 = vsel %vm183, %v175, %v127
    %v185 = vsel %vm183, %v176, %v147
    %v186 = vsel %vm183, %v127, %v175
    %v187 = vsel %vm183, %v147, %v176
    %v188 = vsel %vm183, %v177, %v154
    %v189 = vsel %vm183, %v178, %v174
    %vm190 = vcmp.gt.f32.partialorder %v186, %v188
    %vm191 = vcmp.eq.f32.partialorder %v186, %v188
    %vm192 = vcmp.le.s32.totalorder %v187, %v189
    %vm193 = vmand %vm191, %vm192
    %vm194 = vmor %vm190, %vm193
    %v195 = vsel %vm194, %v186, %v188
    %v196 = vsel %vm194, %v187, %v189
    %vm197 = vcmask 7168
    %198 = vst.msk [vmem:[#allocation2] sm:$0xff] %vm197, %v184
    %199 = vst.msk [vmem:[#allocation3] sm:$0xff] %vm197, %v185
    %200 = vst.msk [vmem:[#allocation4] sm:$0xff] %vm197, %v195
    %201 = vst.msk [vmem:[#allocation5] sm:$0xff] %vm197, %v196
    // Predicated region
    $region22: #{rnn_model_forward.5} parent=1 // pred_check
      %p202 = pneg %p30
    $region23: #{rnn_model_forward.5} parent=1 // pred_check_branch
      %204 = sbr.rel (%p202) target = $region25
    $region24: #{rnn_model_forward.5} parent=1 // pred_region
      %v205 = vld [vmem:[#allocation3] sm:$0xff]
      %206 = vst.msk [vmem:[%s3] sm:$0xff] %vm197, %v205
      %v207 = vld [vmem:[#allocation5] sm:$0xff]
      %208 = vrot.lane.b32.xlu0 %v207, 1
      %v209 = vpop.permute.xlu0 %208
      %vm210 = vcmask 15368
      %211 = vst.msk [vmem:[%s3] sm:$0xff] %vm210, %v209
      %v212 = vld [vmem:[#allocation3] sm:$0xff]
      %213 = vst.msk [vmem:[%s4] sm:$0xff] %vm197, %v212
    $region25: #{rnn_model_forward.5} parent=1 // pred_fallthru
      _
    // Predicated region
    $region26: #{rnn_model_forward.5} parent=1 // pred_check
      _
    $region27: #{rnn_model_forward.5} parent=1 // pred_check_branch
      %215 = sbr.rel (0) target = $region29
    $region28: #{rnn_model_forward.5} parent=1 // pred_region
      _
    $region29: #{rnn_model_forward.5} parent=1 // pred_fallthru
      _
    // Predicated region
    $region30: #{rnn_model_forward.5} parent=1 // pred_check
      _
    $region31: #{rnn_model_forward.5} parent=1 // pred_check_branch
      %217 = sbr.rel (0) target = $region33
    $region32: #{rnn_model_forward.5} parent=1 // pred_region
      _
    $region33: #{rnn_model_forward.5} parent=1 // pred_fallthru
      _
    // Predicated region
    $region34: #{rnn_model_forward.5} parent=1 // pred_check
      _
    $region35: #{rnn_model_forward.5} parent=1 // pred_check_branch
      %219 = sbr.rel (0) target = $region37
    $region36: #{rnn_model_forward.5} parent=1 // pred_region
      _
    $region37: #{rnn_model_forward.5} parent=1 // pred_fallthru
      _
    // Predicated region
    $region38: #{rnn_model_forward.5} parent=1 // pred_check
      _
    $region39: #{rnn_model_forward.5} parent=1 // pred_check_branch
      %221 = sbr.rel (0) target = $region41
    $region40: #{rnn_model_forward.5} parent=1 // pred_region
      _
    $region41: #{rnn_model_forward.5} parent=1 // pred_fallthru
      _
    %222 = vsyncpa [#allocation7], 1

// kernel: rnn_model_forward.3
$region0: #{rnn_model_forward.3}
  #allocation0 [shape = 'u32[]', space=smem, size = 0x4, offset = 0x4, fixed_abs, tag = 'smem constant byte address 0x4 - core index']
  #allocation1 [shape = 'u32[72,128]{1,0:T(1,128)}', space=vmem, size = 0x9000, scoped, tag = 'internal scratch']
  #allocation2 [shape = 'f32[8,8,512]{2,1,0:T(8,128)}', space=vmem, size = 0x20000, scoped, tag = 'scratch operand']
  #allocation3 [shape = 'f32[8,128]{1,0:T(8,128)}', space=vmem, size = 0x1000, scoped, tag = 'scratch operand']
  #allocation4 [shape = 'f32[8,128]{1,0:T(8,128)}', space=vmem, size = 0x1000, scoped, tag = 'scratch operand']
  %s0 = inlined_call_operand.vmem [shape: f32[8,8,128], index: 0, kind: input, shape index: {}]
  %s1 = inlined_call_operand.vmem [shape: f32[128,512], index: 1, kind: input, shape index: {}]
  %s2 = inlined_call_operand.hbm [shape: f32[128,512], index: 2, kind: input, shape index: {}]
  %s3 = inlined_call_operand.vmem [shape: f32[1,512], index: 3, kind: input, shape index: {}]
  %s4 = inlined_call_operand.vmem [shape: f32[8,8,128], index: 4, kind: output, shape index: {}]
  %s5 = sld [smem:[#allocation0]]
  $region37: #{rnn_model_forward.3} parent=0
    _
  %s7 = ssub.s32 1, %s5
  %s8 = scalar_select 0, %s7, %s5
  $region1: #{rnn_model_forward.3} parent=0
    #allocation5 [shape = 'u8[262144]{0}', space=vmem, size = 0x40000, scoped, tag = 'input window, operand 2, single buffered']
    #allocation6 [shape = 's32[1]{0}', space=sflag, size = 0x4, scoped, tag = 'scoped memory for rnn_model_forward.3']
    %9 = vsyncpa [#allocation6], 0
    // Predicated region
    $region2: #{rnn_model_forward.3} parent=1 // pred_check
      _
    $region3: #{rnn_model_forward.3} parent=1 // pred_check_branch
      %11 = sbr.rel (0) target = $region5
    $region4: #{rnn_model_forward.3} parent=1 // pred_region
      _
    $region5: #{rnn_model_forward.3} parent=1 // pred_fallthru
      _
    // Predicated region
    $region6: #{rnn_model_forward.3} parent=1 // pred_check
      _
    $region7: #{rnn_model_forward.3} parent=1 // pred_check_branch
      %13 = sbr.rel (0) target = $region9
    $region8: #{rnn_model_forward.3} parent=1 // pred_region
      _
    $region9: #{rnn_model_forward.3} parent=1 // pred_fallthru
      _
    // Predicated region
    $region10: #{rnn_model_forward.3} parent=1 // pred_check
      _
    $region11: #{rnn_model_forward.3} parent=1 // pred_check_branch
      %15 = sbr.rel (0) target = $region13
    $region12: #{rnn_model_forward.3} parent=1 // pred_region
      %17 = vsyncadd [#allocation6], 0
      %s18 = sshll.u32 %s2, 4
      %s19 = int_to_ptr.hbm [resolvable:$true] %s18
      %s20 = sshll.u32 [#allocation5], 4
      %s21 = int_to_ptr.vmem [resolvable:$true] %s20
      %26 = dma.hbm_to_vmem [thread:$0]  %s19, 8192, %s21, [#allocation6], 512, 512, 32
    $region13: #{rnn_model_forward.3} parent=1 // pred_fallthru
      _
    // Predicated region
    $region14: #{rnn_model_forward.3} parent=1 // pred_check
      _
    $region15: #{rnn_model_forward.3} parent=1 // pred_check_branch
      %28 = sbr.rel (0) target = $region17
    $region16: #{rnn_model_forward.3} parent=1 // pred_region
      _
    $region17: #{rnn_model_forward.3} parent=1 // pred_fallthru
      _
    // Predicated region
    $region18: #{rnn_model_forward.3} parent=1 // pred_check
      _
    $region19: #{rnn_model_forward.3} parent=1 // pred_check_branch
      %30 = sbr.rel (0) target = $region21
    $region20: #{rnn_model_forward.3} parent=1 // pred_region
      %32 = dma.done [#allocation6], 8192
    $region21: #{rnn_model_forward.3} parent=1 // pred_fallthru
      _
    %v33 = vld [vmem:[%s0] sm:$0xff]
    %v34 = vld [vmem:[%s0 + $0x8] sm:$0xff]
    %v35 = vld [vmem:[%s0 + $0x10] sm:$0xff]
    %v36 = vld [vmem:[%s0 + $0x18] sm:$0xff]
    %v37 = vld [vmem:[%s0 + $0x20] sm:$0xff]
    %v38 = vld [vmem:[%s0 + $0x28] sm:$0xff]
    %v39 = vld [vmem:[%s0 + $0x30] sm:$0xff]
    %v40 = vld [vmem:[%s0 + $0x38] sm:$0xff]
    %v41 = vld [vmem:[%s1] sm:$0xff]
    %v42 = vld [vmem:[%s1 + $0x8] sm:$0xff]
    %v43 = vld [vmem:[%s1 + $0x10] sm:$0xff]
    %v44 = vld [vmem:[%s1 + $0x18] sm:$0xff]
    %v45 = vld [vmem:[%s1 + $0x20] sm:$0xff]
    %v46 = vld [vmem:[%s1 + $0x28] sm:$0xff]
    %v47 = vld [vmem:[%s1 + $0x30] sm:$0xff]
    %v48 = vld [vmem:[%s1 + $0x38] sm:$0xff]
    %v49 = vld [vmem:[%s1 + $0x40] sm:$0xff]
    %v50 = vld [vmem:[%s1 + $0x48] sm:$0xff]
    %v51 = vld [vmem:[%s1 + $0x50] sm:$0xff]
    %v52 = vld [vmem:[%s1 + $0x58] sm:$0xff]
    %v53 = vld [vmem:[%s1 + $0x60] sm:$0xff]
    %v54 = vld [vmem:[%s1 + $0x68] sm:$0xff]
    %v55 = vld [vmem:[%s1 + $0x70] sm:$0xff]
    %v56 = vld [vmem:[%s1 + $0x78] sm:$0xff]
    %v57 = vld [vmem:[%s1 + $0x80] sm:$0xff]
    %v58 = vld [vmem:[%s1 + $0x88] sm:$0xff]
    %v59 = vld [vmem:[%s1 + $0x90] sm:$0xff]
    %v60 = vld [vmem:[%s1 + $0x98] sm:$0xff]
    %v61 = vld [vmem:[%s1 + $0xa0] sm:$0xff]
    %v62 = vld [vmem:[%s1 + $0xa8] sm:$0xff]
    %v63 = vld [vmem:[%s1 + $0xb0] sm:$0xff]
    %v64 = vld [vmem:[%s1 + $0xb8] sm:$0xff]
    %v65 = vld [vmem:[%s1 + $0xc0] sm:$0xff]
    %v66 = vld [vmem:[%s1 + $0xc8] sm:$0xff]
    %v67 = vld [vmem:[%s1 + $0xd0] sm:$0xff]
    %v68 = vld [vmem:[%s1 + $0xd8] sm:$0xff]
    %v69 = vld [vmem:[%s1 + $0xe0] sm:$0xff]
    %v70 = vld [vmem:[%s1 + $0xe8] sm:$0xff]
    %v71 = vld [vmem:[%s1 + $0xf0] sm:$0xff]
    %v72 = vld [vmem:[%s1 + $0xf8] sm:$0xff]
    %v73 = vld [vmem:[%s1 + $0x100] sm:$0xff]
    %v74 = vld [vmem:[%s1 + $0x108] sm:$0xff]
    %v75 = vld [vmem:[%s1 + $0x110] sm:$0xff]
    %v76 = vld [vmem:[%s1 + $0x118] sm:$0xff]
    %v77 = vld [vmem:[%s1 + $0x120] sm:$0xff]
    %v78 = vld [vmem:[%s1 + $0x128] sm:$0xff]
    %v79 = vld [vmem:[%s1 + $0x130] sm:$0xff]
    %v80 = vld [vmem:[%s1 + $0x138] sm:$0xff]
    %v81 = vld [vmem:[%s1 + $0x140] sm:$0xff]
    %v82 = vld [vmem:[%s1 + $0x148] sm:$0xff]
    %v83 = vld [vmem:[%s1 + $0x150] sm:$0xff]
    %v84 = vld [vmem:[%s1 + $0x158] sm:$0xff]
    %v85 = vld [vmem:[%s1 + $0x160] sm:$0xff]
    %v86 = vld [vmem:[%s1 + $0x168] sm:$0xff]
    %v87 = vld [vmem:[%s1 + $0x170] sm:$0xff]
    %v88 = vld [vmem:[%s1 + $0x178] sm:$0xff]
    %v89 = vld [vmem:[%s1 + $0x180] sm:$0xff]
    %v90 = vld [vmem:[%s1 + $0x188] sm:$0xff]
    %v91 = vld [vmem:[%s1 + $0x190] sm:$0xff]
    %v92 = vld [vmem:[%s1 + $0x198] sm:$0xff]
    %v93 = vld [vmem:[%s1 + $0x1a0] sm:$0xff]
    %v94 = vld [vmem:[%s1 + $0x1a8] sm:$0xff]
    %v95 = vld [vmem:[%s1 + $0x1b0] sm:$0xff]
    %v96 = vld [vmem:[%s1 + $0x1b8] sm:$0xff]
    %v97 = vld [vmem:[%s1 + $0x1c0] sm:$0xff]
    %v98 = vld [vmem:[%s1 + $0x1c8] sm:$0xff]
    %v99 = vld [vmem:[%s1 + $0x1d0] sm:$0xff]
    %v100 = vld [vmem:[%s1 + $0x1d8] sm:$0xff]
    %v101 = vld [vmem:[%s1 + $0x1e0] sm:$0xff]
    %v102 = vld [vmem:[%s1 + $0x1e8] sm:$0xff]
    %v103 = vld [vmem:[%s1 + $0x1f0] sm:$0xff]
    %v104 = vld [vmem:[%s1 + $0x1f8] sm:$0xff]
    %v105 = vld [vmem:[%s3] sm:$0xf]
    %v107 = vperm.slane %v105, 0
    %v108 = vperm.slane %v105, 1
    %v109 = vperm.slane %v105, 2
    %v110 = vperm.slane %v105, 3
    %115 = vmatpush.msra.mxu0 %v101
    %116 = vmatpush.msra.mxu0 %v97
    %117 = vmatpush.msra.mxu0 %v93
    %118 = vmatpush.msra.mxu0 %v89
    %119 = vmatpush.msra.mxu0 %v85
    %120 = vmatpush.msra.mxu0 %v81
    %121 = vmatpush.msra.mxu0 %v77
    %122 = vmatpush.msra.mxu0 %v73
    %123 = vmatpush.msra.mxu0 %v69
    %124 = vmatpush.msra.mxu0 %v65
    %125 = vmatpush.msra.mxu0 %v61
    %126 = vmatpush.msra.mxu0 %v57
    %127 = vmatpush.msra.mxu0 %v53
    %128 = vmatpush.msra.mxu0 %v49
    %129 = vmatpush.msra.mxu0 %v45
    %130 = vmatpush.msra.mxu0 %v41
    %131 = vmatmul.f32.gmra.mxu0 %v33
    %v132 = vpop.f32.mrf.mxu0
    %v133 = vadd.f32 %v107, %v132
    %134 = vmatmul.f32.gmra.mxu0 %v34
    %v135 = vpop.f32.mrf.mxu0
    %v136 = vadd.f32 %v107, %v135
    %137 = vmatmul.f32.gmra.mxu0 %v35
    %v138 = vpop.f32.mrf.mxu0
    %v139 = vadd.f32 %v107, %v138
    %140 = vmatmul.f32.gmra.mxu0 %v36
    %v141 = vpop.f32.mrf.mxu0
    %v142 = vadd.f32 %v107, %v141
    %143 = vmatmul.f32.gmra.mxu0 %v37
    %v144 = vpop.f32.mrf.mxu0
    %v145 = vadd.f32 %v107, %v144
    %146 = vmatmul.f32.gmra.mxu0 %v38
    %v147 = vpop.f32.mrf.mxu0
    %v148 = vadd.f32 %v107, %v147
    %149 = vmatmul.f32.gmra.mxu0 %v39
    %v150 = vpop.f32.mrf.mxu0
    %v151 = vadd.f32 %v107, %v150
    %152 = vmatmul.f32.gmra.mxu0 %v40
    %v153 = vpop.f32.mrf.mxu0
    %v154 = vadd.f32 %v107, %v153
    %155 = vdwg.mxu0
    %156 = vmatpush.msra.mxu0 %v102
    %157 = vmatpush.msra.mxu0 %v98
    %158 = vmatpush.msra.mxu0 %v94
    %159 = vmatpush.msra.mxu0 %v90
    %160 = vmatpush.msra.mxu0 %v86
    %161 = vmatpush.msra.mxu0 %v82
    %162 = vmatpush.msra.mxu0 %v78
    %163 = vmatpush.msra.mxu0 %v74
    %164 = vmatpush.msra.mxu0 %v70
    %165 = vmatpush.msra.mxu0 %v66
    %166 = vmatpush.msra.mxu0 %v62
    %167 = vmatpush.msra.mxu0 %v58
    %168 = vmatpush.msra.mxu0 %v54
    %169 = vmatpush.msra.mxu0 %v50
    %170 = vmatpush.msra.mxu0 %v46
    %171 = vmatpush.msra.mxu0 %v42
    %172 = vmatmul.f32.gmra.mxu0 %v33
    %v173 = vpop.f32.mrf.mxu0
    %v174 = vadd.f32 %v108, %v173
    %175 = vmatmul.f32.gmra.mxu0 %v34
    %v176 = vpop.f32.mrf.mxu0
    %v177 = vadd.f32 %v108, %v176
    %178 = vmatmul.f32.gmra.mxu0 %v35
    %v179 = vpop.f32.mrf.mxu0
    %v180 = vadd.f32 %v108, %v179
    %181 = vmatmul.f32.gmra.mxu0 %v36
    %v182 = vpop.f32.mrf.mxu0
    %v183 = vadd.f32 %v108, %v182
    %184 = vmatmul.f32.gmra.mxu0 %v37
    %v185 = vpop.f32.mrf.mxu0
    %v186 = vadd.f32 %v108, %v185
    %187 = vmatmul.f32.gmra.mxu0 %v38
    %v188 = vpop.f32.mrf.mxu0
    %v189 = vadd.f32 %v108, %v188
    %190 = vmatmul.f32.gmra.mxu0 %v39
    %v191 = vpop.f32.mrf.mxu0
    %v192 = vadd.f32 %v108, %v191
    %193 = vmatmul.f32.gmra.mxu0 %v40
    %v194 = vpop.f32.mrf.mxu0
    %v195 = vadd.f32 %v108, %v194
    %196 = vdwg.mxu0
    %197 = vmatpush.msra.mxu0 %v103
    %198 = vmatpush.msra.mxu0 %v99
    %199 = vmatpush.msra.mxu0 %v95
    %200 = vmatpush.msra.mxu0 %v91
    %201 = vmatpush.msra.mxu0 %v87
    %202 = vmatpush.msra.mxu0 %v83
    %203 = vmatpush.msra.mxu0 %v79
    %204 = vmatpush.msra.mxu0 %v75
    %205 = vmatpush.msra.mxu0 %v71
    %206 = vmatpush.msra.mxu0 %v67
    %207 = vmatpush.msra.mxu0 %v63
    %208 = vmatpush.msra.mxu0 %v59
    %209 = vmatpush.msra.mxu0 %v55
    %210 = vmatpush.msra.mxu0 %v51
    %211 = vmatpush.msra.mxu0 %v47
    %212 = vmatpush.msra.mxu0 %v43
    %213 = vmatmul.f32.gmra.mxu0 %v33
    %v214 = vpop.f32.mrf.mxu0
    %v215 = vadd.f32 %v109, %v214
    %216 = vmatmul.f32.gmra.mxu0 %v34
    %v217 = vpop.f32.mrf.mxu0
    %v218 = vadd.f32 %v109, %v217
    %219 = vmatmul.f32.gmra.mxu0 %v35
    %v220 = vpop.f32.mrf.mxu0
    %v221 = vadd.f32 %v109, %v220
    %222 = vmatmul.f32.gmra.mxu0 %v36
    %v223 = vpop.f32.mrf.mxu0
    %v224 = vadd.f32 %v109, %v223
    %225 = vmatmul.f32.gmra.mxu0 %v37
    %v226 = vpop.f32.mrf.mxu0
    %v227 = vadd.f32 %v109, %v226
    %228 = vmatmul.f32.gmra.mxu0 %v38
    %v229 = vpop.f32.mrf.mxu0
    %v230 = vadd.f32 %v109, %v229
    %231 = vmatmul.f32.gmra.mxu0 %v39
    %v232 = vpop.f32.mrf.mxu0
    %v233 = vadd.f32 %v109, %v232
    %234 = vmatmul.f32.gmra.mxu0 %v40
    %v235 = vpop.f32.mrf.mxu0
    %v236 = vadd.f32 %v109, %v235
    %237 = vdwg.mxu0
    %238 = vmatpush.msra.mxu0 %v104
    %239 = vmatpush.msra.mxu0 %v100
    %240 = vmatpush.msra.mxu0 %v96
    %241 = vmatpush.msra.mxu0 %v92
    %242 = vmatpush.msra.mxu0 %v88
    %243 = vmatpush.msra.mxu0 %v84
    %244 = vmatpush.msra.mxu0 %v80
    %245 = vmatpush.msra.mxu0 %v76
    %246 = vmatpush.msra.mxu0 %v72
    %247 = vmatpush.msra.mxu0 %v68
    %248 = vmatpush.msra.mxu0 %v64
    %249 = vmatpush.msra.mxu0 %v60
    %250 = vmatpush.msra.mxu0 %v56
    %251 = vmatpush.msra.mxu0 %v52
    %252 = vmatpush.msra.mxu0 %v48
    %253 = vmatpush.msra.mxu0 %v44
    %254 = vmatmul.f32.gmra.mxu0 %v33
    %v255 = vpop.f32.mrf.mxu0
    %v256 = vadd.f32 %v110, %v255
    %257 = vmatmul.f32.gmra.mxu0 %v34
    %v258 = vpop.f32.mrf.mxu0
    %v259 = vadd.f32 %v110, %v258
    %260 = vmatmul.f32.gmra.mxu0 %v35
    %v261 = vpop.f32.mrf.mxu0
    %v262 = vadd.f32 %v110, %v261
    %263 = vmatmul.f32.gmra.mxu0 %v36
    %v264 = vpop.f32.mrf.mxu0
    %v265 = vadd.f32 %v110, %v264
    %266 = vmatmul.f32.gmra.mxu0 %v37
    %v267 = vpop.f32.mrf.mxu0
    %v268 = vadd.f32 %v110, %v267
    %269 = vmatmul.f32.gmra.mxu0 %v38
    %v270 = vpop.f32.mrf.mxu0
    %v271 = vadd.f32 %v110, %v270
    %272 = vmatmul.f32.gmra.mxu0 %v39
    %v273 = vpop.f32.mrf.mxu0
    %v274 = vadd.f32 %v110, %v273
    %275 = vmatmul.f32.gmra.mxu0 %v40
    %v276 = vpop.f32.mrf.mxu0
    %v277 = vadd.f32 %v110, %v276
    %278 = vdwg.mxu0
    %279 = vst [vmem:[#allocation2] sm:$0xff] %v133
    %280 = vst [vmem:[#allocation2 + $0x8] sm:$0xff] %v174
    %281 = vst [vmem:[#allocation2 + $0x10] sm:$0xff] %v215
    %282 = vst [vmem:[#allocation2 + $0x18] sm:$0xff] %v256
    %283 = vst [vmem:[#allocation2 + $0x20] sm:$0xff] %v136
    %284 = vst [vmem:[#allocation2 + $0x28] sm:$0xff] %v177
    %285 = vst [vmem:[#allocation2 + $0x30] sm:$0xff] %v218
    %286 = vst [vmem:[#allocation2 + $0x38] sm:$0xff] %v259
    %287 = vst [vmem:[#allocation2 + $0x40] sm:$0xff] %v139
    %288 = vst [vmem:[#allocation2 + $0x48] sm:$0xff] %v180
    %289 = vst [vmem:[#allocation2 + $0x50] sm:$0xff] %v221
    %290 = vst [vmem:[#allocation2 + $0x58] sm:$0xff] %v262
    %291 = vst [vmem:[#allocation2 + $0x60] sm:$0xff] %v142
    %292 = vst [vmem:[#allocation2 + $0x68] sm:$0xff] %v183
    %293 = vst [vmem:[#allocation2 + $0x70] sm:$0xff] %v224
    %294 = vst [vmem:[#allocation2 + $0x78] sm:$0xff] %v265
    %295 = vst [vmem:[#allocation2 + $0x80] sm:$0xff] %v145
    %296 = vst [vmem:[#allocation2 + $0x88] sm:$0xff] %v186
    %297 = vst [vmem:[#allocation2 + $0x90] sm:$0xff] %v227
    %298 = vst [vmem:[#allocation2 + $0x98] sm:$0xff] %v268
    %299 = vst [vmem:[#allocation2 + $0xa0] sm:$0xff] %v148
    %300 = vst [vmem:[#allocation2 + $0xa8] sm:$0xff] %v189
    %301 = vst [vmem:[#allocation2 + $0xb0] sm:$0xff] %v230
    %302 = vst [vmem:[#allocation2 + $0xb8] sm:$0xff] %v271
    %303 = vst [vmem:[#allocation2 + $0xc0] sm:$0xff] %v151
    %304 = vst [vmem:[#allocation2 + $0xc8] sm:$0xff] %v192
    %305 = vst [vmem:[#allocation2 + $0xd0] sm:$0xff] %v233
    %306 = vst [vmem:[#allocation2 + $0xd8] sm:$0xff] %v274
    %307 = vst [vmem:[#allocation2 + $0xe0] sm:$0xff] %v154
    %308 = vst [vmem:[#allocation2 + $0xe8] sm:$0xff] %v195
    %309 = vst [vmem:[#allocation2 + $0xf0] sm:$0xff] %v236
    %310 = vst [vmem:[#allocation2 + $0xf8] sm:$0xff] %v277
    %311 = vst [vmem:[#allocation3] sm:$0xff] 0.0
    %312 = vst [vmem:[#allocation4] sm:$0xff] 0.0
    %v313 = vld [vmem:[#allocation5] sm:$0xff]
    %v314 = vld [vmem:[#allocation5 + $0x8] sm:$0xff]
    %v315 = vld [vmem:[#allocation5 + $0x10] sm:$0xff]
    %v316 = vld [vmem:[#allocation5 + $0x18] sm:$0xff]
    %v317 = vld [vmem:[#allocation5 + $0x20] sm:$0xff]
    %v318 = vld [vmem:[#allocation5 + $0x28] sm:$0xff]
    %v319 = vld [vmem:[#allocation5 + $0x30] sm:$0xff]
    %v320 = vld [vmem:[#allocation5 + $0x38] sm:$0xff]
    %v321 = vld [vmem:[#allocation5 + $0x40] sm:$0xff]
    %v322 = vld [vmem:[#allocation5 + $0x48] sm:$0xff]
    %v323 = vld [vmem:[#allocation5 + $0x50] sm:$0xff]
    %v324 = vld [vmem:[#allocation5 + $0x58] sm:$0xff]
    %v325 = vld [vmem:[#allocation5 + $0x60] sm:$0xff]
    %v326 = vld [vmem:[#allocation5 + $0x68] sm:$0xff]
    %v327 = vld [vmem:[#allocation5 + $0x70] sm:$0xff]
    %v328 = vld [vmem:[#allocation5 + $0x78] sm:$0xff]
    %v329 = vld [vmem:[#allocation5 + $0x80] sm:$0xff]
    %v330 = vld [vmem:[#allocation5 + $0x88] sm:$0xff]
    %v331 = vld [vmem:[#allocation5 + $0x90] sm:$0xff]
    %v332 = vld [vmem:[#allocation5 + $0x98] sm:$0xff]
    %v333 = vld [vmem:[#allocation5 + $0xa0] sm:$0xff]
    %v334 = vld [vmem:[#allocation5 + $0xa8] sm:$0xff]
    %v335 = vld [vmem:[#allocation5 + $0xb0] sm:$0xff]
    %v336 = vld [vmem:[#allocation5 + $0xb8] sm:$0xff]
    %v337 = vld [vmem:[#allocation5 + $0xc0] sm:$0xff]
    %v338 = vld [vmem:[#allocation5 + $0xc8] sm:$0xff]
    %v339 = vld [vmem:[#allocation5 + $0xd0] sm:$0xff]
    %v340 = vld [vmem:[#allocation5 + $0xd8] sm:$0xff]
    %v341 = vld [vmem:[#allocation5 + $0xe0] sm:$0xff]
    %v342 = vld [vmem:[#allocation5 + $0xe8] sm:$0xff]
    %v343 = vld [vmem:[#allocation5 + $0xf0] sm:$0xff]
    %v344 = vld [vmem:[#allocation5 + $0xf8] sm:$0xff]
    %v345 = vld [vmem:[#allocation5 + $0x100] sm:$0xff]
    %v346 = vld [vmem:[#allocation5 + $0x108] sm:$0xff]
    %v347 = vld [vmem:[#allocation5 + $0x110] sm:$0xff]
    %v348 = vld [vmem:[#allocation5 + $0x118] sm:$0xff]
    %v349 = vld [vmem:[#allocation5 + $0x120] sm:$0xff]
    %v350 = vld [vmem:[#allocation5 + $0x128] sm:$0xff]
    %v351 = vld [vmem:[#allocation5 + $0x130] sm:$0xff]
    %v352 = vld [vmem:[#allocation5 + $0x138] sm:$0xff]
    %v353 = vld [vmem:[#allocation5 + $0x140] sm:$0xff]
    %v354 = vld [vmem:[#allocation5 + $0x148] sm:$0xff]
    %v355 = vld [vmem:[#allocation5 + $0x150] sm:$0xff]
    %v356 = vld [vmem:[#allocation5 + $0x158] sm:$0xff]
    %v357 = vld [vmem:[#allocation5 + $0x160] sm:$0xff]
    %v358 = vld [vmem:[#allocation5 + $0x168] sm:$0xff]
    %v359 = vld [vmem:[#allocation5 + $0x170] sm:$0xff]
    %v360 = vld [vmem:[#allocation5 + $0x178] sm:$0xff]
    %v361 = vld [vmem:[#allocation5 + $0x180] sm:$0xff]
    %v362 = vld [vmem:[#allocation5 + $0x188] sm:$0xff]
    %v363 = vld [vmem:[#allocation5 + $0x190] sm:$0xff]
    %v364 = vld [vmem:[#allocation5 + $0x198] sm:$0xff]
    %v365 = vld [vmem:[#allocation5 + $0x1a0] sm:$0xff]
    %v366 = vld [vmem:[#allocation5 + $0x1a8] sm:$0xff]
    %v367 = vld [vmem:[#allocation5 + $0x1b0] sm:$0xff]
    %v368 = vld [vmem:[#allocation5 + $0x1b8] sm:$0xff]
    %v369 = vld [vmem:[#allocation5 + $0x1c0] sm:$0xff]
    %v370 = vld [vmem:[#allocation5 + $0x1c8] sm:$0xff]
    %v371 = vld [vmem:[#allocation5 + $0x1d0] sm:$0xff]
    %v372 = vld [vmem:[#allocation5 + $0x1d8] sm:$0xff]
    %v373 = vld [vmem:[#allocation5 + $0x1e0] sm:$0xff]
    %v374 = vld [vmem:[#allocation5 + $0x1e8] sm:$0xff]
    %v375 = vld [vmem:[#allocation5 + $0x1f0] sm:$0xff]
    %v376 = vld [vmem:[#allocation5 + $0x1f8] sm:$0xff]
    loop: start=0, step=1, limit=8
    $region22: #{rnn_model_forward.3} parent=1 // loop_pre_header
      _
    $region23: #{rnn_model_forward.3} parent=1 // loop_header
      %s378 = sphi 0, %s382
      %p379 = scmp.ge.s32.totalorder %s378, 8
    $region24: #{rnn_model_forward.3} parent=1 // loop_header_branch
      %381 = sbr.rel (%p379) target = $region28
    $region25: #{rnn_model_forward.3} parent=1 // loop_body
      %s383 = smul.u32 %s378, 4
      %s384 = smul.addr %s383, 8
      %s385 = scalar_lea.vmem [#allocation2], %s384
      %v386 = vld [vmem:[%s385] sm:$0xff]
      %v387 = vld [vmem:[%s385 + $0x8] sm:$0xff]
      %v388 = vld [vmem:[%s385 + $0x10] sm:$0xff]
      %v389 = vld [vmem:[%s385 + $0x18] sm:$0xff]
      %v390 = vld [vmem:[#allocation3] sm:$0xff]
      %391 = vmatpush.msra.mxu0 %v373
      %392 = vmatpush.msra.mxu0 %v369
      %393 = vmatpush.msra.mxu0 %v365
      %394 = vmatpush.msra.mxu0 %v361
      %395 = vmatpush.msra.mxu0 %v357
      %396 = vmatpush.msra.mxu0 %v353
      %397 = vmatpush.msra.mxu0 %v349
      %398 = vmatpush.msra.mxu0 %v345
      %399 = vmatpush.msra.mxu0 %v341
      %400 = vmatpush.msra.mxu0 %v337
      %401 = vmatpush.msra.mxu0 %v333
      %402 = vmatpush.msra.mxu0 %v329
      %403 = vmatpush.msra.mxu0 %v325
      %404 = vmatpush.msra.mxu0 %v321
      %405 = vmatpush.msra.mxu0 %v317
      %406 = vmatpush.msra.mxu0 %v313
      %407 = vmatmul.f32.gmra.mxu0 %v390
      %v408 = vpop.f32.mrf.mxu0
      %v409 = vadd.f32 0.0, %v408
      %410 = vdwg.mxu0
      %411 = vmatpush.msra.mxu0 %v374
      %412 = vmatpush.msra.mxu0 %v370
      %413 = vmatpush.msra.mxu0 %v366
      %414 = vmatpush.msra.mxu0 %v362
      %415 = vmatpush.msra.mxu0 %v358
      %416 = vmatpush.msra.mxu0 %v354
      %417 = vmatpush.msra.mxu0 %v350
      %418 = vmatpush.msra.mxu0 %v346
      %419 = vmatpush.msra.mxu0 %v342
      %420 = vmatpush.msra.mxu0 %v338
      %421 = vmatpush.msra.mxu0 %v334
      %422 = vmatpush.msra.mxu0 %v330
      %423 = vmatpush.msra.mxu0 %v326
      %424 = vmatpush.msra.mxu0 %v322
      %425 = vmatpush.msra.mxu0 %v318
      %426 = vmatpush.msra.mxu0 %v314
      %427 = vmatmul.f32.gmra.mxu0 %v390
      %v428 = vpop.f32.mrf.mxu0
      %v429 = vadd.f32 0.0, %v428
      %430 = vdwg.mxu0
      %431 = vmatpush.msra.mxu0 %v375
      %432 = vmatpush.msra.mxu0 %v371
      %433 = vmatpush.msra.mxu0 %v367
      %434 = vmatpush.msra.mxu0 %v363
      %435 = vmatpush.msra.mxu0 %v359
      %436 = vmatpush.msra.mxu0 %v355
      %437 = vmatpush.msra.mxu0 %v351
      %438 = vmatpush.msra.mxu0 %v347
      %439 = vmatpush.msra.mxu0 %v343
      %440 = vmatpush.msra.mxu0 %v339
      %441 = vmatpush.msra.mxu0 %v335
      %442 = vmatpush.msra.mxu0 %v331
      %443 = vmatpush.msra.mxu0 %v327
      %444 = vmatpush.msra.mxu0 %v323
      %445 = vmatpush.msra.mxu0 %v319
      %446 = vmatpush.msra.mxu0 %v315
      %447 = vmatmul.f32.gmra.mxu0 %v390
      %v448 = vpop.f32.mrf.mxu0
      %v449 = vadd.f32 0.0, %v448
      %450 = vdwg.mxu0
      %451 = vmatpush.msra.mxu0 %v376
      %452 = vmatpush.msra.mxu0 %v372
      %453 = vmatpush.msra.mxu0 %v368
      %454 = vmatpush.msra.mxu0 %v364
      %455 = vmatpush.msra.mxu0 %v360
      %456 = vmatpush.msra.mxu0 %v356
      %457 = vmatpush.msra.mxu0 %v352
      %458 = vmatpush.msra.mxu0 %v348
      %459 = vmatpush.msra.mxu0 %v344
      %460 = vmatpush.msra.mxu0 %v340
      %461 = vmatpush.msra.mxu0 %v336
      %462 = vmatpush.msra.mxu0 %v332
      %463 = vmatpush.msra.mxu0 %v328
      %464 = vmatpush.msra.mxu0 %v324
      %465 = vmatpush.msra.mxu0 %v320
      %466 = vmatpush.msra.mxu0 %v316
      %467 = vmatmul.f32.gmra.mxu0 %v390
      %v468 = vpop.f32.mrf.mxu0
      %v469 = vadd.f32 0.0, %v468
      %470 = vdwg.mxu0
      %v471 = vadd.f32 %v386, %v409
      %v472 = vadd.f32 %v387, %v429
      %v473 = vadd.f32 %v388, %v449
      %v474 = vadd.f32 %v389, %v469
      %v475 = vxor.u32 %v471, 2147483648
      %v476 = vmul.f32 %v475, 1.442695
      %v477 = vpow.pop %v476
      %v478 = vadd.f32 %v477, 1.0
      %v479 = vrcp.pop %v478
      %v480 = vmul.f32 %v478, %v479
      %v481 = vsub.f32 1.0, %v480
      %v482 = vmul.f32 %v479, %v481
      %v483 = vadd.f32 %v479, %v482
      %vm484 = vweird.f32 %v478
      %vm485 = vweird.f32 %v479
      %vm486 = vmor %vm484, %vm485
      %v487 = vsel %vm486, %v479, %v483
      %v488 = vand.u32 2147483647, %v478
      %vm489 = vcmp.eq.f32.partialorder %v488, 8.507059e+37
      %v490 = vand.u32 %v478, 2147483648
      %v491 = vor.u32 1.1754944e-38, %v490
      %v492 = vsel %vm489, %v491, %v487
      %v493 = vmul.f32 1.0, %v492
      %v494 = vxor.u32 %v472, 2147483648
      %v495 = vmul.f32 %v494, 1.442695
      %v496 = vpow.pop %v495
      %v497 = vadd.f32 %v496, 1.0
      %v498 = vrcp.pop %v497
      %v499 = vmul.f32 %v497, %v498
      %v500 = vsub.f32 1.0, %v499
      %v501 = vmul.f32 %v498, %v500
      %v502 = vadd.f32 %v498, %v501
      %vm503 = vweird.f32 %v497
      %vm504 = vweird.f32 %v498
      %vm505 = vmor %vm503, %vm504
      %v506 = vsel %vm505, %v498, %v502
      %v507 = vand.u32 2147483647, %v497
      %vm508 = vcmp.eq.f32.partialorder %v507, 8.507059e+37
      %v509 = vand.u32 %v497, 2147483648
      %v510 = vor.u32 1.1754944e-38, %v509
      %v511 = vsel %vm508, %v510, %v506
      %v512 = vmul.f32 1.0, %v511
      %v513 = vtanh.pop %v473
      %v514 = vxor.u32 %v474, 2147483648
      %v515 = vmul.f32 %v514, 1.442695
      %v516 = vpow.pop %v515
      %v517 = vadd.f32 %v516, 1.0
      %v518 = vrcp.pop %v517
      %v519 = vmul.f32 %v517, %v518
      %v520 = vsub.f32 1.0, %v519
      %v521 = vmul.f32 %v518, %v520
      %v522 = vadd.f32 %v518, %v521
      %vm523 = vweird.f32 %v517
      %vm524 = vweird.f32 %v518
      %vm525 = vmor %vm523, %vm524
      %v526 = vsel %vm525, %v518, %v522
      %v527 = vand.u32 2147483647, %v517
      %vm528 = vcmp.eq.f32.partialorder %v527, 8.507059e+37
      %v529 = vand.u32 %v517, 2147483648
      %v530 = vor.u32 1.1754944e-38, %v529
      %v531 = vsel %vm528, %v530, %v526
      %v532 = vmul.f32 1.0, %v531
      %v533 = vld [vmem:[#allocation4] sm:$0xff]
      %v534 = vmul.f32 %v512, %v533
      %v535 = vmul.f32 %v493, %v513
      %v536 = vadd.f32 %v534, %v535
      %v537 = vtanh.pop %v536
      %v538 = vmul.f32 %v532, %v537
      %539 = vst [vmem:[#allocation4] sm:$0xff] %v536
      %540 = vst [vmem:[#allocation3] sm:$0xff] %v538
      %s541 = smul.u32 %s378, 8
      %s542 = scalar_lea.vmem %s4, %s541
      %543 = vst [vmem:[%s542] sm:$0xff] %v538
    $region26: #{rnn_model_forward.3} parent=1 // loop_footer
      %s382 = sadd.s32 1, %s378
    $region27: #{rnn_model_forward.3} parent=1 // loop_footer_branch
      %377 = sbr.rel target = $region23
    $region28: #{rnn_model_forward.3} parent=1 // loop_exit
      _
    // Predicated region
    $region29: #{rnn_model_forward.3} parent=1 // pred_check
      _
    $region30: #{rnn_model_forward.3} parent=1 // pred_check_branch
      %545 = sbr.rel (0) target = $region32
    $region31: #{rnn_model_forward.3} parent=1 // pred_region
      _
    $region32: #{rnn_model_forward.3} parent=1 // pred_fallthru
      _
    // Predicated region
    $region33: #{rnn_model_forward.3} parent=1 // pred_check
      _
    $region34: #{rnn_model_forward.3} parent=1 // pred_check_branch
      %547 = sbr.rel (0) target = $region36
    $region35: #{rnn_model_forward.3} parent=1 // pred_region
      _
    $region36: #{rnn_model_forward.3} parent=1 // pred_fallthru
      _
    %548 = vsyncpa [#allocation6], 1

// kernel: rnn_model_forward.4
$region0: #{rnn_model_forward.4}
  #allocation0 [shape = 'u32[]', space=smem, size = 0x4, offset = 0x4, fixed_abs, tag = 'smem constant byte address 0x4 - core index']
  #allocation1 [shape = 'u32[72,128]{1,0:T(1,128)}', space=vmem, size = 0x9000, scoped, tag = 'internal scratch']
  #allocation2 [shape = 'f32[8,8,512]{2,1,0:T(8,128)}', space=vmem, size = 0x20000, scoped, tag = 'scratch operand']
  #allocation3 [shape = 'f32[8,128]{1,0:T(8,128)}', space=vmem, size = 0x1000, scoped, tag = 'scratch operand']
  #allocation4 [shape = 'f32[8,128]{1,0:T(8,128)}', space=vmem, size = 0x1000, scoped, tag = 'scratch operand']
  %s0 = inlined_call_operand.vmem [shape: f32[8,8,128], index: 0, kind: input, shape index: {}]
  %s1 = inlined_call_operand.hbm [shape: f32[128,512], index: 1, kind: input, shape index: {}]
  %s2 = inlined_call_operand.hbm [shape: f32[128,512], index: 2, kind: input, shape index: {}]
  %s3 = inlined_call_operand.vmem [shape: f32[1,512], index: 3, kind: input, shape index: {}]
  %s4 = inlined_call_operand.vmem [shape: f32[8,8,128], index: 4, kind: output, shape index: {}]
  %s5 = sld [smem:[#allocation0]]
  $region41: #{rnn_model_forward.4} parent=0
    _
  %s7 = ssub.s32 1, %s5
  %s8 = scalar_select 0, %s7, %s5
  $region1: #{rnn_model_forward.4} parent=0
    #allocation5 [shape = 'u8[262144]{0}', space=vmem, size = 0x40000, scoped, tag = 'input window, operand 1, single buffered']
    #allocation6 [shape = 's32[1]{0}', space=sflag, size = 0x4, scoped, tag = 'scoped memory for rnn_model_forward.4']
    #allocation7 [shape = 'u8[262144]{0}', space=vmem, size = 0x40000, scoped, tag = 'input window, operand 2, single buffered']
    #allocation8 [shape = 's32[1]{0}', space=sflag, size = 0x4, scoped, tag = 'scoped memory for rnn_model_forward.4']
    %9 = vsyncpa [#allocation6], 0
    %10 = vsyncpa [#allocation8], 0
    // Predicated region
    $region2: #{rnn_model_forward.4} parent=1 // pred_check
      _
    $region3: #{rnn_model_forward.4} parent=1 // pred_check_branch
      %12 = sbr.rel (0) target = $region5
    $region4: #{rnn_model_forward.4} parent=1 // pred_region
      _
    $region5: #{rnn_model_forward.4} parent=1 // pred_fallthru
      _
    // Predicated region
    $region6: #{rnn_model_forward.4} parent=1 // pred_check
      _
    $region7: #{rnn_model_forward.4} parent=1 // pred_check_branch
      %14 = sbr.rel (0) target = $region9
    $region8: #{rnn_model_forward.4} parent=1 // pred_region
      %16 = vsyncadd [#allocation6], 0
      %s17 = sshll.u32 %s1, 4
      %s18 = int_to_ptr.hbm [resolvable:$true] %s17
      %s19 = sshll.u32 [#allocation5], 4
      %s20 = int_to_ptr.vmem [resolvable:$true] %s19
      %25 = dma.hbm_to_vmem [thread:$0]  %s18, 8192, %s20, [#allocation6], 512, 512, 32
    $region9: #{rnn_model_forward.4} parent=1 // pred_fallthru
      _
    // Predicated region
    $region10: #{rnn_model_forward.4} parent=1 // pred_check
      _
    $region11: #{rnn_model_forward.4} parent=1 // pred_check_branch
      %27 = sbr.rel (0) target = $region13
    $region12: #{rnn_model_forward.4} parent=1 // pred_region
      %29 = vsyncadd [#allocation8], 0
      %s30 = sshll.u32 %s2, 4
      %s31 = int_to_ptr.hbm [resolvable:$true] %s30
      %s32 = sshll.u32 [#allocation7], 4
      %s33 = int_to_ptr.vmem [resolvable:$true] %s32
      %38 = dma.hbm_to_vmem [thread:$0]  %s31, 8192, %s33, [#allocation8], 512, 512, 32
    $region13: #{rnn_model_forward.4} parent=1 // pred_fallthru
      _
    // Predicated region
    $region14: #{rnn_model_forward.4} parent=1 // pred_check
      _
    $region15: #{rnn_model_forward.4} parent=1 // pred_check_branch
      %40 = sbr.rel (0) target = $region17
    $region16: #{rnn_model_forward.4} parent=1 // pred_region
      _
    $region17: #{rnn_model_forward.4} parent=1 // pred_fallthru
      _
    // Predicated region
    $region18: #{rnn_model_forward.4} parent=1 // pred_check
      _
    $region19: #{rnn_model_forward.4} parent=1 // pred_check_branch
      %42 = sbr.rel (0) target = $region21
    $region20: #{rnn_model_forward.4} parent=1 // pred_region
      %44 = dma.done [#allocation6], 8192
    $region21: #{rnn_model_forward.4} parent=1 // pred_fallthru
      _
    // Predicated region
    $region22: #{rnn_model_forward.4} parent=1 // pred_check
      _
    $region23: #{rnn_model_forward.4} parent=1 // pred_check_branch
      %46 = sbr.rel (0) target = $region25
    $region24: #{rnn_model_forward.4} parent=1 // pred_region
      %48 = dma.done [#allocation8], 8192
    $region25: #{rnn_model_forward.4} parent=1 // pred_fallthru
      _
    %v49 = vld [vmem:[%s0] sm:$0xff]
    %v50 = vld [vmem:[%s0 + $0x8] sm:$0xff]
    %v51 = vld [vmem:[%s0 + $0x10] sm:$0xff]
    %v52 = vld [vmem:[%s0 + $0x18] sm:$0xff]
    %v53 = vld [vmem:[%s0 + $0x20] sm:$0xff]
    %v54 = vld [vmem:[%s0 + $0x28] sm:$0xff]
    %v55 = vld [vmem:[%s0 + $0x30] sm:$0xff]
    %v56 = vld [vmem:[%s0 + $0x38] sm:$0xff]
    %v57 = vld [vmem:[#allocation5] sm:$0xff]
    %v58 = vld [vmem:[#allocation5 + $0x8] sm:$0xff]
    %v59 = vld [vmem:[#allocation5 + $0x10] sm:$0xff]
    %v60 = vld [vmem:[#allocation5 + $0x18] sm:$0xff]
    %v61 = vld [vmem:[#allocation5 + $0x20] sm:$0xff]
    %v62 = vld [vmem:[#allocation5 + $0x28] sm:$0xff]
    %v63 = vld [vmem:[#allocation5 + $0x30] sm:$0xff]
    %v64 = vld [vmem:[#allocation5 + $0x38] sm:$0xff]
    %v65 = vld [vmem:[#allocation5 + $0x40] sm:$0xff]
    %v66 = vld [vmem:[#allocation5 + $0x48] sm:$0xff]
    %v67 = vld [vmem:[#allocation5 + $0x50] sm:$0xff]
    %v68 = vld [vmem:[#allocation5 + $0x58] sm:$0xff]
    %v69 = vld [vmem:[#allocation5 + $0x60] sm:$0xff]
    %v70 = vld [vmem:[#allocation5 + $0x68] sm:$0xff]
    %v71 = vld [vmem:[#allocation5 + $0x70] sm:$0xff]
    %v72 = vld [vmem:[#allocation5 + $0x78] sm:$0xff]
    %v73 = vld [vmem:[#allocation5 + $0x80] sm:$0xff]
    %v74 = vld [vmem:[#allocation5 + $0x88] sm:$0xff]
    %v75 = vld [vmem:[#allocation5 + $0x90] sm:$0xff]
    %v76 = vld [vmem:[#allocation5 + $0x98] sm:$0xff]
    %v77 = vld [vmem:[#allocation5 + $0xa0] sm:$0xff]
    %v78 = vld [vmem:[#allocation5 + $0xa8] sm:$0xff]
    %v79 = vld [vmem:[#allocation5 + $0xb0] sm:$0xff]
    %v80 = vld [vmem:[#allocation5 + $0xb8] sm:$0xff]
    %v81 = vld [vmem:[#allocation5 + $0xc0] sm:$0xff]
    %v82 = vld [vmem:[#allocation5 + $0xc8] sm:$0xff]
    %v83 = vld [vmem:[#allocation5 + $0xd0] sm:$0xff]
    %v84 = vld [vmem:[#allocation5 + $0xd8] sm:$0xff]
    %v85 = vld [vmem:[#allocation5 + $0xe0] sm:$0xff]
    %v86 = vld [vmem:[#allocation5 + $0xe8] sm:$0xff]
    %v87 = vld [vmem:[#allocation5 + $0xf0] sm:$0xff]
    %v88 = vld [vmem:[#allocation5 + $0xf8] sm:$0xff]
    %v89 = vld [vmem:[#allocation5 + $0x100] sm:$0xff]
    %v90 = vld [vmem:[#allocation5 + $0x108] sm:$0xff]
    %v91 = vld [vmem:[#allocation5 + $0x110] sm:$0xff]
    %v92 = vld [vmem:[#allocation5 + $0x118] sm:$0xff]
    %v93 = vld [vmem:[#allocation5 + $0x120] sm:$0xff]
    %v94 = vld [vmem:[#allocation5 + $0x128] sm:$0xff]
    %v95 = vld [vmem:[#allocation5 + $0x130] sm:$0xff]
    %v96 = vld [vmem:[#allocation5 + $0x138] sm:$0xff]
    %v97 = vld [vmem:[#allocation5 + $0x140] sm:$0xff]
    %v98 = vld [vmem:[#allocation5 + $0x148] sm:$0xff]
    %v99 = vld [vmem:[#allocation5 + $0x150] sm:$0xff]
    %v100 = vld [vmem:[#allocation5 + $0x158] sm:$0xff]
    %v101 = vld [vmem:[#allocation5 + $0x160] sm:$0xff]
    %v102 = vld [vmem:[#allocation5 + $0x168] sm:$0xff]
    %v103 = vld [vmem:[#allocation5 + $0x170] sm:$0xff]
    %v104 = vld [vmem:[#allocation5 + $0x178] sm:$0xff]
    %v105 = vld [vmem:[#allocation5 + $0x180] sm:$0xff]
    %v106 = vld [vmem:[#allocation5 + $0x188] sm:$0xff]
    %v107 = vld [vmem:[#allocation5 + $0x190] sm:$0xff]
    %v108 = vld [vmem:[#allocation5 + $0x198] sm:$0xff]
    %v109 = vld [vmem:[#allocation5 + $0x1a0] sm:$0xff]
    %v110 = vld [vmem:[#allocation5 + $0x1a8] sm:$0xff]
    %v111 = vld [vmem:[#allocation5 + $0x1b0] sm:$0xff]
    %v112 = vld [vmem:[#allocation5 + $0x1b8] sm:$0xff]
    %v113 = vld [vmem:[#allocation5 + $0x1c0] sm:$0xff]
    %v114 = vld [vmem:[#allocation5 + $0x1c8] sm:$0xff]
    %v115 = vld [vmem:[#allocation5 + $0x1d0] sm:$0xff]
    %v116 = vld [vmem:[#allocation5 + $0x1d8] sm:$0xff]
    %v117 = vld [vmem:[#allocation5 + $0x1e0] sm:$0xff]
    %v118 = vld [vmem:[#allocation5 + $0x1e8] sm:$0xff]
    %v119 = vld [vmem:[#allocation5 + $0x1f0] sm:$0xff]
    %v120 = vld [vmem:[#allocation5 + $0x1f8] sm:$0xff]
    %v121 = vld [vmem:[%s3] sm:$0xf]
    %v123 = vperm.slane %v121, 0
    %v124 = vperm.slane %v121, 1
    %v125 = vperm.slane %v121, 2
    %v126 = vperm.slane %v121, 3
    %131 = vmatpush.msra.mxu0 %v117
    %132 = vmatpush.msra.mxu0 %v113
    %133 = vmatpush.msra.mxu0 %v109
    %134 = vmatpush.msra.mxu0 %v105
    %135 = vmatpush.msra.mxu0 %v101
    %136 = vmatpush.msra.mxu0 %v97
    %137 = vmatpush.msra.mxu0 %v93
    %138 = vmatpush.msra.mxu0 %v89
    %139 = vmatpush.msra.mxu0 %v85
    %140 = vmatpush.msra.mxu0 %v81
    %141 = vmatpush.msra.mxu0 %v77
    %142 = vmatpush.msra.mxu0 %v73
    %143 = vmatpush.msra.mxu0 %v69
    %144 = vmatpush.msra.mxu0 %v65
    %145 = vmatpush.msra.mxu0 %v61
    %146 = vmatpush.msra.mxu0 %v57
    %147 = vmatmul.f32.gmra.mxu0 %v49
    %v148 = vpop.f32.mrf.mxu0
    %v149 = vadd.f32 %v123, %v148
    %150 = vmatmul.f32.gmra.mxu0 %v50
    %v151 = vpop.f32.mrf.mxu0
    %v152 = vadd.f32 %v123, %v151
    %153 = vmatmul.f32.gmra.mxu0 %v51
    %v154 = vpop.f32.mrf.mxu0
    %v155 = vadd.f32 %v123, %v154
    %156 = vmatmul.f32.gmra.mxu0 %v52
    %v157 = vpop.f32.mrf.mxu0
    %v158 = vadd.f32 %v123, %v157
    %159 = vmatmul.f32.gmra.mxu0 %v53
    %v160 = vpop.f32.mrf.mxu0
    %v161 = vadd.f32 %v123, %v160
    %162 = vmatmul.f32.gmra.mxu0 %v54
    %v163 = vpop.f32.mrf.mxu0
    %v164 = vadd.f32 %v123, %v163
    %165 = vmatmul.f32.gmra.mxu0 %v55
    %v166 = vpop.f32.mrf.mxu0
    %v167 = vadd.f32 %v123, %v166
    %168 = vmatmul.f32.gmra.mxu0 %v56
    %v169 = vpop.f32.mrf.mxu0
    %v170 = vadd.f32 %v123, %v169
    %171 = vdwg.mxu0
    %172 = vmatpush.msra.mxu0 %v118
    %173 = vmatpush.msra.mxu0 %v114
    %174 = vmatpush.msra.mxu0 %v110
    %175 = vmatpush.msra.mxu0 %v106
    %176 = vmatpush.msra.mxu0 %v102
    %177 = vmatpush.msra.mxu0 %v98
    %178 = vmatpush.msra.mxu0 %v94
    %179 = vmatpush.msra.mxu0 %v90
    %180 = vmatpush.msra.mxu0 %v86
    %181 = vmatpush.msra.mxu0 %v82
    %182 = vmatpush.msra.mxu0 %v78
    %183 = vmatpush.msra.mxu0 %v74
    %184 = vmatpush.msra.mxu0 %v70
    %185 = vmatpush.msra.mxu0 %v66
    %186 = vmatpush.msra.mxu0 %v62
    %187 = vmatpush.msra.mxu0 %v58
    %188 = vmatmul.f32.gmra.mxu0 %v49
    %v189 = vpop.f32.mrf.mxu0
    %v190 = vadd.f32 %v124, %v189
    %191 = vmatmul.f32.gmra.mxu0 %v50
    %v192 = vpop.f32.mrf.mxu0
    %v193 = vadd.f32 %v124, %v192
    %194 = vmatmul.f32.gmra.mxu0 %v51
    %v195 = vpop.f32.mrf.mxu0
    %v196 = vadd.f32 %v124, %v195
    %197 = vmatmul.f32.gmra.mxu0 %v52
    %v198 = vpop.f32.mrf.mxu0
    %v199 = vadd.f32 %v124, %v198
    %200 = vmatmul.f32.gmra.mxu0 %v53
    %v201 = vpop.f32.mrf.mxu0
    %v202 = vadd.f32 %v124, %v201
    %203 = vmatmul.f32.gmra.mxu0 %v54
    %v204 = vpop.f32.mrf.mxu0
    %v205 = vadd.f32 %v124, %v204
    %206 = vmatmul.f32.gmra.mxu0 %v55
    %v207 = vpop.f32.mrf.mxu0
    %v208 = vadd.f32 %v124, %v207
    %209 = vmatmul.f32.gmra.mxu0 %v56
    %v210 = vpop.f32.mrf.mxu0
    %v211 = vadd.f32 %v124, %v210
    %212 = vdwg.mxu0
    %213 = vmatpush.msra.mxu0 %v119
    %214 = vmatpush.msra.mxu0 %v115
    %215 = vmatpush.msra.mxu0 %v111
    %216 = vmatpush.msra.mxu0 %v107
    %217 = vmatpush.msra.mxu0 %v103
    %218 = vmatpush.msra.mxu0 %v99
    %219 = vmatpush.msra.mxu0 %v95
    %220 = vmatpush.msra.mxu0 %v91
    %221 = vmatpush.msra.mxu0 %v87
    %222 = vmatpush.msra.mxu0 %v83
    %223 = vmatpush.msra.mxu0 %v79
    %224 = vmatpush.msra.mxu0 %v75
    %225 = vmatpush.msra.mxu0 %v71
    %226 = vmatpush.msra.mxu0 %v67
    %227 = vmatpush.msra.mxu0 %v63
    %228 = vmatpush.msra.mxu0 %v59
    %229 = vmatmul.f32.gmra.mxu0 %v49
    %v230 = vpop.f32.mrf.mxu0
    %v231 = vadd.f32 %v125, %v230
    %232 = vmatmul.f32.gmra.mxu0 %v50
    %v233 = vpop.f32.mrf.mxu0
    %v234 = vadd.f32 %v125, %v233
    %235 = vmatmul.f32.gmra.mxu0 %v51
    %v236 = vpop.f32.mrf.mxu0
    %v237 = vadd.f32 %v125, %v236
    %238 = vmatmul.f32.gmra.mxu0 %v52
    %v239 = vpop.f32.mrf.mxu0
    %v240 = vadd.f32 %v125, %v239
    %241 = vmatmul.f32.gmra.mxu0 %v53
    %v242 = vpop.f32.mrf.mxu0
    %v243 = vadd.f32 %v125, %v242
    %244 = vmatmul.f32.gmra.mxu0 %v54
    %v245 = vpop.f32.mrf.mxu0
    %v246 = vadd.f32 %v125, %v245
    %247 = vmatmul.f32.gmra.mxu0 %v55
    %v248 = vpop.f32.mrf.mxu0
    %v249 = vadd.f32 %v125, %v248
    %250 = vmatmul.f32.gmra.mxu0 %v56
    %v251 = vpop.f32.mrf.mxu0
    %v252 = vadd.f32 %v125, %v251
    %253 = vdwg.mxu0
    %254 = vmatpush.msra.mxu0 %v120
    %255 = vmatpush.msra.mxu0 %v116
    %256 = vmatpush.msra.mxu0 %v112
    %257 = vmatpush.msra.mxu0 %v108
    %258 = vmatpush.msra.mxu0 %v104
    %259 = vmatpush.msra.mxu0 %v100
    %260 = vmatpush.msra.mxu0 %v96
    %261 = vmatpush.msra.mxu0 %v92
    %262 = vmatpush.msra.mxu0 %v88
    %263 = vmatpush.msra.mxu0 %v84
    %264 = vmatpush.msra.mxu0 %v80
    %265 = vmatpush.msra.mxu0 %v76
    %266 = vmatpush.msra.mxu0 %v72
    %267 = vmatpush.msra.mxu0 %v68
    %268 = vmatpush.msra.mxu0 %v64
    %269 = vmatpush.msra.mxu0 %v60
    %270 = vmatmul.f32.gmra.mxu0 %v49
    %v271 = vpop.f32.mrf.mxu0
    %v272 = vadd.f32 %v126, %v271
    %273 = vmatmul.f32.gmra.mxu0 %v50
    %v274 = vpop.f32.mrf.mxu0
    %v275 = vadd.f32 %v126, %v274
    %276 = vmatmul.f32.gmra.mxu0 %v51
    %v277 = vpop.f32.mrf.mxu0
    %v278 = vadd.f32 %v126, %v277
    %279 = vmatmul.f32.gmra.mxu0 %v52
    %v280 = vpop.f32.mrf.mxu0
    %v281 = vadd.f32 %v126, %v280
    %282 = vmatmul.f32.gmra.mxu0 %v53
    %v283 = vpop.f32.mrf.mxu0
    %v284 = vadd.f32 %v126, %v283
    %285 = vmatmul.f32.gmra.mxu0 %v54
    %v286 = vpop.f32.mrf.mxu0
    %v287 = vadd.f32 %v126, %v286
    %288 = vmatmul.f32.gmra.mxu0 %v55
    %v289 = vpop.f32.mrf.mxu0
    %v290 = vadd.f32 %v126, %v289
    %291 = vmatmul.f32.gmra.mxu0 %v56
    %v292 = vpop.f32.mrf.mxu0
    %v293 = vadd.f32 %v126, %v292
    %294 = vdwg.mxu0
    %295 = vst [vmem:[#allocation2] sm:$0xff] %v149
    %296 = vst [vmem:[#allocation2 + $0x8] sm:$0xff] %v190
    %297 = vst [vmem:[#allocation2 + $0x10] sm:$0xff] %v231
    %298 = vst [vmem:[#allocation2 + $0x18] sm:$0xff] %v272
    %299 = vst [vmem:[#allocation2 + $0x20] sm:$0xff] %v152
    %300 = vst [vmem:[#allocation2 + $0x28] sm:$0xff] %v193
    %301 = vst [vmem:[#allocation2 + $0x30] sm:$0xff] %v234
    %302 = vst [vmem:[#allocation2 + $0x38] sm:$0xff] %v275
    %303 = vst [vmem:[#allocation2 + $0x40] sm:$0xff] %v155
    %304 = vst [vmem:[#allocation2 + $0x48] sm:$0xff] %v196
    %305 = vst [vmem:[#allocation2 + $0x50] sm:$0xff] %v237
    %306 = vst [vmem:[#allocation2 + $0x58] sm:$0xff] %v278
    %307 = vst [vmem:[#allocation2 + $0x60] sm:$0xff] %v158
    %308 = vst [vmem:[#allocation2 + $0x68] sm:$0xff] %v199
    %309 = vst [vmem:[#allocation2 + $0x70] sm:$0xff] %v240
    %310 = vst [vmem:[#allocation2 + $0x78] sm:$0xff] %v281
    %311 = vst [vmem:[#allocation2 + $0x80] sm:$0xff] %v161
    %312 = vst [vmem:[#allocation2 + $0x88] sm:$0xff] %v202
    %313 = vst [vmem:[#allocation2 + $0x90] sm:$0xff] %v243
    %314 = vst [vmem:[#allocation2 + $0x98] sm:$0xff] %v284
    %315 = vst [vmem:[#allocation2 + $0xa0] sm:$0xff] %v164
    %316 = vst [vmem:[#allocation2 + $0xa8] sm:$0xff] %v205
    %317 = vst [vmem:[#allocation2 + $0xb0] sm:$0xff] %v246
    %318 = vst [vmem:[#allocation2 + $0xb8] sm:$0xff] %v287
    %319 = vst [vmem:[#allocation2 + $0xc0] sm:$0xff] %v167
    %320 = vst [vmem:[#allocation2 + $0xc8] sm:$0xff] %v208
    %321 = vst [vmem:[#allocation2 + $0xd0] sm:$0xff] %v249
    %322 = vst [vmem:[#allocation2 + $0xd8] sm:$0xff] %v290
    %323 = vst [vmem:[#allocation2 + $0xe0] sm:$0xff] %v170
    %324 = vst [vmem:[#allocation2 + $0xe8] sm:$0xff] %v211
    %325 = vst [vmem:[#allocation2 + $0xf0] sm:$0xff] %v252
    %326 = vst [vmem:[#allocation2 + $0xf8] sm:$0xff] %v293
    %327 = vst [vmem:[#allocation3] sm:$0xff] 0.0
    %328 = vst [vmem:[#allocation4] sm:$0xff] 0.0
    %v329 = vld [vmem:[#allocation7] sm:$0xff]
    %v330 = vld [vmem:[#allocation7 + $0x8] sm:$0xff]
    %v331 = vld [vmem:[#allocation7 + $0x10] sm:$0xff]
    %v332 = vld [vmem:[#allocation7 + $0x18] sm:$0xff]
    %v333 = vld [vmem:[#allocation7 + $0x20] sm:$0xff]
    %v334 = vld [vmem:[#allocation7 + $0x28] sm:$0xff]
    %v335 = vld [vmem:[#allocation7 + $0x30] sm:$0xff]
    %v336 = vld [vmem:[#allocation7 + $0x38] sm:$0xff]
    %v337 = vld [vmem:[#allocation7 + $0x40] sm:$0xff]
    %v338 = vld [vmem:[#allocation7 + $0x48] sm:$0xff]
    %v339 = vld [vmem:[#allocation7 + $0x50] sm:$0xff]
    %v340 = vld [vmem:[#allocation7 + $0x58] sm:$0xff]
    %v341 = vld [vmem:[#allocation7 + $0x60] sm:$0xff]
    %v342 = vld [vmem:[#allocation7 + $0x68] sm:$0xff]
    %v343 = vld [vmem:[#allocation7 + $0x70] sm:$0xff]
    %v344 = vld [vmem:[#allocation7 + $0x78] sm:$0xff]
    %v345 = vld [vmem:[#allocation7 + $0x80] sm:$0xff]
    %v346 = vld [vmem:[#allocation7 + $0x88] sm:$0xff]
    %v347 = vld [vmem:[#allocation7 + $0x90] sm:$0xff]
    %v348 = vld [vmem:[#allocation7 + $0x98] sm:$0xff]
    %v349 = vld [vmem:[#allocation7 + $0xa0] sm:$0xff]
    %v350 = vld [vmem:[#allocation7 + $0xa8] sm:$0xff]
    %v351 = vld [vmem:[#allocation7 + $0xb0] sm:$0xff]
    %v352 = vld [vmem:[#allocation7 + $0xb8] sm:$0xff]
    %v353 = vld [vmem:[#allocation7 + $0xc0] sm:$0xff]
    %v354 = vld [vmem:[#allocation7 + $0xc8] sm:$0xff]
    %v355 = vld [vmem:[#allocation7 + $0xd0] sm:$0xff]
    %v356 = vld [vmem:[#allocation7 + $0xd8] sm:$0xff]
    %v357 = vld [vmem:[#allocation7 + $0xe0] sm:$0xff]
    %v358 = vld [vmem:[#allocation7 + $0xe8] sm:$0xff]
    %v359 = vld [vmem:[#allocation7 + $0xf0] sm:$0xff]
    %v360 = vld [vmem:[#allocation7 + $0xf8] sm:$0xff]
    %v361 = vld [vmem:[#allocation7 + $0x100] sm:$0xff]
    %v362 = vld [vmem:[#allocation7 + $0x108] sm:$0xff]
    %v363 = vld [vmem:[#allocation7 + $0x110] sm:$0xff]
    %v364 = vld [vmem:[#allocation7 + $0x118] sm:$0xff]
    %v365 = vld [vmem:[#allocation7 + $0x120] sm:$0xff]
    %v366 = vld [vmem:[#allocation7 + $0x128] sm:$0xff]
    %v367 = vld [vmem:[#allocation7 + $0x130] sm:$0xff]
    %v368 = vld [vmem:[#allocation7 + $0x138] sm:$0xff]
    %v369 = vld [vmem:[#allocation7 + $0x140] sm:$0xff]
    %v370 = vld [vmem:[#allocation7 + $0x148] sm:$0xff]
    %v371 = vld [vmem:[#allocation7 + $0x150] sm:$0xff]
    %v372 = vld [vmem:[#allocation7 + $0x158] sm:$0xff]
    %v373 = vld [vmem:[#allocation7 + $0x160] sm:$0xff]
    %v374 = vld [vmem:[#allocation7 + $0x168] sm:$0xff]
    %v375 = vld [vmem:[#allocation7 + $0x170] sm:$0xff]
    %v376 = vld [vmem:[#allocation7 + $0x178] sm:$0xff]
    %v377 = vld [vmem:[#allocation7 + $0x180] sm:$0xff]
    %v378 = vld [vmem:[#allocation7 + $0x188] sm:$0xff]
    %v379 = vld [vmem:[#allocation7 + $0x190] sm:$0xff]
    %v380 = vld [vmem:[#allocation7 + $0x198] sm:$0xff]
    %v381 = vld [vmem:[#allocation7 + $0x1a0] sm:$0xff]
    %v382 = vld [vmem:[#allocation7 + $0x1a8] sm:$0xff]
    %v383 = vld [vmem:[#allocation7 + $0x1b0] sm:$0xff]
    %v384 = vld [vmem:[#allocation7 + $0x1b8] sm:$0xff]
    %v385 = vld [vmem:[#allocation7 + $0x1c0] sm:$0xff]
    %v386 = vld [vmem:[#allocation7 + $0x1c8] sm:$0xff]
    %v387 = vld [vmem:[#allocation7 + $0x1d0] sm:$0xff]
    %v388 = vld [vmem:[#allocation7 + $0x1d8] sm:$0xff]
    %v389 = vld [vmem:[#allocation7 + $0x1e0] sm:$0xff]
    %v390 = vld [vmem:[#allocation7 + $0x1e8] sm:$0xff]
    %v391 = vld [vmem:[#allocation7 + $0x1f0] sm:$0xff]
    %v392 = vld [vmem:[#allocation7 + $0x1f8] sm:$0xff]
    loop: start=0, step=1, limit=8
    $region26: #{rnn_model_forward.4} parent=1 // loop_pre_header
      _
    $region27: #{rnn_model_forward.4} parent=1 // loop_header
      %s394 = sphi 0, %s398
      %p395 = scmp.ge.s32.totalorder %s394, 8
    $region28: #{rnn_model_forward.4} parent=1 // loop_header_branch
      %397 = sbr.rel (%p395) target = $region32
    $region29: #{rnn_model_forward.4} parent=1 // loop_body
      %s399 = smul.u32 %s394, 4
      %s400 = smul.addr %s399, 8
      %s401 = scalar_lea.vmem [#allocation2], %s400
      %v402 = vld [vmem:[%s401] sm:$0xff]
      %v403 = vld [vmem:[%s401 + $0x8] sm:$0xff]
      %v404 = vld [vmem:[%s401 + $0x10] sm:$0xff]
      %v405 = vld [vmem:[%s401 + $0x18] sm:$0xff]
      %v406 = vld [vmem:[#allocation3] sm:$0xff]
      %407 = vmatpush.msra.mxu0 %v389
      %408 = vmatpush.msra.mxu0 %v385
      %409 = vmatpush.msra.mxu0 %v381
      %410 = vmatpush.msra.mxu0 %v377
      %411 = vmatpush.msra.mxu0 %v373
      %412 = vmatpush.msra.mxu0 %v369
      %413 = vmatpush.msra.mxu0 %v365
      %414 = vmatpush.msra.mxu0 %v361
      %415 = vmatpush.msra.mxu0 %v357
      %416 = vmatpush.msra.mxu0 %v353
      %417 = vmatpush.msra.mxu0 %v349
      %418 = vmatpush.msra.mxu0 %v345
      %419 = vmatpush.msra.mxu0 %v341
      %420 = vmatpush.msra.mxu0 %v337
      %421 = vmatpush.msra.mxu0 %v333
      %422 = vmatpush.msra.mxu0 %v329
      %423 = vmatmul.f32.gmra.mxu0 %v406
      %v424 = vpop.f32.mrf.mxu0
      %v425 = vadd.f32 0.0, %v424
      %426 = vdwg.mxu0
      %427 = vmatpush.msra.mxu0 %v390
      %428 = vmatpush.msra.mxu0 %v386
      %429 = vmatpush.msra.mxu0 %v382
      %430 = vmatpush.msra.mxu0 %v378
      %431 = vmatpush.msra.mxu0 %v374
      %432 = vmatpush.msra.mxu0 %v370
      %433 = vmatpush.msra.mxu0 %v366
      %434 = vmatpush.msra.mxu0 %v362
      %435 = vmatpush.msra.mxu0 %v358
      %436 = vmatpush.msra.mxu0 %v354
      %437 = vmatpush.msra.mxu0 %v350
      %438 = vmatpush.msra.mxu0 %v346
      %439 = vmatpush.msra.mxu0 %v342
      %440 = vmatpush.msra.mxu0 %v338
      %441 = vmatpush.msra.mxu0 %v334
      %442 = vmatpush.msra.mxu0 %v330
      %443 = vmatmul.f32.gmra.mxu0 %v406
      %v444 = vpop.f32.mrf.mxu0
      %v445 = vadd.f32 0.0, %v444
      %446 = vdwg.mxu0
      %447 = vmatpush.msra.mxu0 %v391
      %448 = vmatpush.msra.mxu0 %v387
      %449 = vmatpush.msra.mxu0 %v383
      %450 = vmatpush.msra.mxu0 %v379
      %451 = vmatpush.msra.mxu0 %v375
      %452 = vmatpush.msra.mxu0 %v371
      %453 = vmatpush.msra.mxu0 %v367
      %454 = vmatpush.msra.mxu0 %v363
      %455 = vmatpush.msra.mxu0 %v359
      %456 = vmatpush.msra.mxu0 %v355
      %457 = vmatpush.msra.mxu0 %v351
      %458 = vmatpush.msra.mxu0 %v347
      %459 = vmatpush.msra.mxu0 %v343
      %460 = vmatpush.msra.mxu0 %v339
      %461 = vmatpush.msra.mxu0 %v335
      %462 = vmatpush.msra.mxu0 %v331
      %463 = vmatmul.f32.gmra.mxu0 %v406
      %v464 = vpop.f32.mrf.mxu0
      %v465 = vadd.f32 0.0, %v464
      %466 = vdwg.mxu0
      %467 = vmatpush.msra.mxu0 %v392
      %468 = vmatpush.msra.mxu0 %v388
      %469 = vmatpush.msra.mxu0 %v384
      %470 = vmatpush.msra.mxu0 %v380
      %471 = vmatpush.msra.mxu0 %v376
      %472 = vmatpush.msra.mxu0 %v372
      %473 = vmatpush.msra.mxu0 %v368
      %474 = vmatpush.msra.mxu0 %v364
      %475 = vmatpush.msra.mxu0 %v360
      %476 = vmatpush.msra.mxu0 %v356
      %477 = vmatpush.msra.mxu0 %v352
      %478 = vmatpush.msra.mxu0 %v348
      %479 = vmatpush.msra.mxu0 %v344
      %480 = vmatpush.msra.mxu0 %v340
      %481 = vmatpush.msra.mxu0 %v336
      %482 = vmatpush.msra.mxu0 %v332
      %483 = vmatmul.f32.gmra.mxu0 %v406
      %v484 = vpop.f32.mrf.mxu0
      %v485 = vadd.f32 0.0, %v484
      %486 = vdwg.mxu0
      %v487 = vadd.f32 %v402, %v425
      %v488 = vadd.f32 %v403, %v445
      %v489 = vadd.f32 %v404, %v465
      %v490 = vadd.f32 %v405, %v485
      %v491 = vxor.u32 %v487, 2147483648
      %v492 = vmul.f32 %v491, 1.442695
      %v493 = vpow.pop %v492
      %v494 = vadd.f32 %v493, 1.0
      %v495 = vrcp.pop %v494
      %v496 = vmul.f32 %v494, %v495
      %v497 = vsub.f32 1.0, %v496
      %v498 = vmul.f32 %v495, %v497
      %v499 = vadd.f32 %v495, %v498
      %vm500 = vweird.f32 %v494
      %vm501 = vweird.f32 %v495
      %vm502 = vmor %vm500, %vm501
      %v503 = vsel %vm502, %v495, %v499
      %v504 = vand.u32 2147483647, %v494
      %vm505 = vcmp.eq.f32.partialorder %v504, 8.507059e+37
      %v506 = vand.u32 %v494, 2147483648
      %v507 = vor.u32 1.1754944e-38, %v506
      %v508 = vsel %vm505, %v507, %v503
      %v509 = vmul.f32 1.0, %v508
      %v510 = vxor.u32 %v488, 2147483648
      %v511 = vmul.f32 %v510, 1.442695
      %v512 = vpow.pop %v511
      %v513 = vadd.f32 %v512, 1.0
      %v514 = vrcp.pop %v513
      %v515 = vmul.f32 %v513, %v514
      %v516 = vsub.f32 1.0, %v515
      %v517 = vmul.f32 %v514, %v516
      %v518 = vadd.f32 %v514, %v517
      %vm519 = vweird.f32 %v513
      %vm520 = vweird.f32 %v514
      %vm521 = vmor %vm519, %vm520
      %v522 = vsel %vm521, %v514, %v518
      %v523 = vand.u32 2147483647, %v513
      %vm524 = vcmp.eq.f32.partialorder %v523, 8.507059e+37
      %v525 = vand.u32 %v513, 2147483648
      %v526 = vor.u32 1.1754944e-38, %v525
      %v527 = vsel %vm524, %v526, %v522
      %v528 = vmul.f32 1.0, %v527
      %v529 = vtanh.pop %v489
      %v530 = vxor.u32 %v490, 2147483648
      %v531 = vmul.f32 %v530, 1.442695
      %v532 = vpow.pop %v531
      %v533 = vadd.f32 %v532, 1.0
      %v534 = vrcp.pop %v533
      %v535 = vmul.f32 %v533, %v534
      %v536 = vsub.f32 1.0, %v535
      %v537 = vmul.f32 %v534, %v536
      %v538 = vadd.f32 %v534, %v537
      %vm539 = vweird.f32 %v533
      %vm540 = vweird.f32 %v534
      %vm541 = vmor %vm539, %vm540
      %v542 = vsel %vm541, %v534, %v538
      %v543 = vand.u32 2147483647, %v533
      %vm544 = vcmp.eq.f32.partialorder %v543, 8.507059e+37
      %v545 = vand.u32 %v533, 2147483648
      %v546 = vor.u32 1.1754944e-38, %v545
      %v547 = vsel %vm544, %v546, %v542
      %v548 = vmul.f32 1.0, %v547
      %v549 = vld [vmem:[#allocation4] sm:$0xff]
      %v550 = vmul.f32 %v528, %v549
      %v551 = vmul.f32 %v509, %v529
      %v552 = vadd.f32 %v550, %v551
      %v553 = vtanh.pop %v552
      %v554 = vmul.f32 %v548, %v553
      %555 = vst [vmem:[#allocation4] sm:$0xff] %v552
      %556 = vst [vmem:[#allocation3] sm:$0xff] %v554
      %s557 = smul.u32 %s394, 8
      %s558 = scalar_lea.vmem %s4, %s557
      %559 = vst [vmem:[%s558] sm:$0xff] %v554
    $region30: #{rnn_model_forward.4} parent=1 // loop_footer
      %s398 = sadd.s32 1, %s394
    $region31: #{rnn_model_forward.4} parent=1 // loop_footer_branch
      %393 = sbr.rel target = $region27
    $region32: #{rnn_model_forward.4} parent=1 // loop_exit
      _
    // Predicated region
    $region33: #{rnn_model_forward.4} parent=1 // pred_check
      _
    $region34: #{rnn_model_forward.4} parent=1 // pred_check_branch
      %561 = sbr.rel (0) target = $region36
    $region35: #{rnn_model_forward.4} parent=1 // pred_region
      _
    $region36: #{rnn_model_forward.4} parent=1 // pred_fallthru
      _
    // Predicated region
    $region37: #{rnn_model_forward.4} parent=1 // pred_check
      _
    $region38: #{rnn_model_forward.4} parent=1 // pred_check_branch
      %563 = sbr.rel (0) target = $region40
    $region39: #{rnn_model_forward.4} parent=1 // pred_region
      _
    $region40: #{rnn_model_forward.4} parent=1 // pred_fallthru
      _
    %564 = vsyncpa [#allocation6], 1
    %565 = vsyncpa [#allocation8], 1

</llo_original>
